<compile_context>
chip_gen: v7x
topology: tpu7x:2x2x1
jax: 0.10.0
libtpu: 0.0.40
codegen_flags: <defaults>
</compile_context>

<pallas_src>
import jax
import jax.numpy as jnp
from jax.experimental import pallas as pl
from jax.experimental.pallas import tpu as pltpu

D_MODEL = 8
N_HEADS = 2
D_FF = 2048      # PyTorch default dim_feedforward
LN_EPS = 1e-5


def _layernorm(v, g, b, eps=LN_EPS):
    m = jnp.mean(v, axis=-1, keepdims=True)
    c = v - m
    var = jnp.mean(c * c, axis=-1, keepdims=True)
    return c * jax.lax.rsqrt(var + eps) * g + b


def encoder_kernel(xa_ref, wall_ref, w1b_ref, w2_ref, vecs_ref, out_ref):
    B = out_ref.shape[0]
    BS = xa_ref.shape[0] - B          # = B * S
    S = BS // B
    D = D_MODEL
    H = N_HEADS
    Hd = D // H
    scale = 1.0 / float(Hd) ** 0.5

    xa = xa_ref[...]                  # (B*S + B, D): [x_flat ; x_token0]
    w_all = wall_ref[...]             # (D, 4D): [Wq | Wk | Wv | Wo] (pre-transposed)
    vecs = vecs_ref[...]              # (11, D)

    bq, bk, bv = vecs[0:1], vecs[1:2], vecs[2:3]
    bo, b2 = vecs[3:4], vecs[4:5]
    g1, be1 = vecs[5:6], vecs[6:7]
    g2, be2 = vecs[7:8], vecs[8:9]
    gf, bef = vecs[9:10], vecs[10:11]

    # ---- fused Q/K/V/(O) in-projection: one MXU push for everything ----
    qkvo = jnp.dot(xa, w_all, preferred_element_type=jnp.float32)   # (B*S+B, 4D)

    k = qkvo[0:BS, D:2 * D] + bk      # (B*S, D)
    v = qkvo[0:BS, 2 * D:3 * D] + bv  # (B*S, D)
    q0 = qkvo[BS:BS + B, 0:D] + bq    # (B, D)   queries for token 0 only
    x0 = xa[BS:BS + B, :]             # (B, D)   residual input for token 0

    # ---- token-0 attention over all keys (VPU broadcast-mul-reduce, no tiny MXU ops) ----
    k3 = k.reshape(B, S, D)
    v3 = v.reshape(B, S, D)
    prod = q0.reshape(B, 1, D) * k3   # (B, S, D)

    head_outs = []
    for h in range(H):                # H = 2: static unroll over head lane-slices only
        lo, hi = h * Hd, (h + 1) * Hd
        sh = jnp.sum(prod[:, :, lo:hi], axis=-1) * scale            # (B, S) scores
        sh = sh - jnp.max(sh, axis=-1, keepdims=True)
        e = jnp.exp(sh)
        p = e * pl.reciprocal(jnp.sum(e, axis=-1, keepdims=True), approx=True)
        head_outs.append(jnp.sum(p[:, :, None] * v3[:, :, lo:hi], axis=1))  # (B, Hd)
    attn0 = jnp.concatenate(head_outs, axis=-1)                     # (B, D)

    # ---- out-projection + residual + norm1 (post-norm) ----
    attn0 = jnp.dot(attn0, w_all[:, 3 * D:4 * D],
                    preferred_element_type=jnp.float32) + bo
    y = _layernorm(x0 + attn0, g1, be1)                             # (B, D)

    # ---- feed-forward on the B token-0 rows only ----
    w1b = w1b_ref[...]                # (D+1, D_FF): rows 0..D-1 = W1, row D = b1
    h1 = jnp.dot(y, w1b[0:D, :], preferred_element_type=jnp.float32) + w1b[D:D + 1, :]
    h1 = jnp.maximum(h1, 0.0)         # relu
    h2 = jnp.dot(h1, w2_ref[...], preferred_element_type=jnp.float32) + b2

    # ---- residual + norm2, then final TransformerEncoder LayerNorm ----
    z = _layernorm(y + h2, g2, be2)
    z = _layernorm(z, gf, bef)

    out_ref[...] = z                  # (B, D) written directly, no gather


def dummy_encoder_forward(x, params):
    # x: (B, S, D), batch_first=True, float32.
    # TODO(synk): src_mask / key_padding_mask not implemented (DummyEncoder never passes one).
    B, S, D = x.shape
    w_all, w1b, w2, vecs = params
    x_flat = x.reshape(B * S, D)                    # wrapper-side layout plumbing
    x0 = x[:, 0, :]
    xa = jnp.concatenate([x_flat, x0], axis=0)      # (B*S + B, D)

    vmem = pl.BlockSpec(memory_space=pltpu.MemorySpace.VMEM)
    flops = (2 * (B * S + B) * D * 4 * D            # fused in-projection
             + 2 * B * D * D                        # out-projection
             + 4 * B * D * D_FF                     # FF pair (token-0 rows only)
             + 8 * B * S * D)                       # attention VPU work
    bytes_accessed = 4 * (xa.size + w_all.size + w1b.size + w2.size + vecs.size + B * D)
    return pl.pallas_call(
        encoder_kernel,
        out_shape=jax.ShapeDtypeStruct((B, D), jnp.float32),
        in_specs=[vmem] * 5,
        out_specs=vmem,
        cost_estimate=pl.CostEstimate(
            flops=flops,
            transcendentals=B * S * N_HEADS,
            bytes_accessed=bytes_accessed),
    )(xa, w_all, w1b, w2, vecs)


def make_params(key):
    D = D_MODEL
    ks = jax.random.split(key, 12)

    def init(k, shape, scale=0.1):
        return (scale * jax.random.normal(k, shape)).astype(jnp.float32)

    # PyTorch parameter layouts, then packed for the kernel.
    in_proj_w = init(ks[0], (3 * D, D))             # MultiheadAttention in_proj_weight
    in_proj_b = init(ks[1], (3 * D,))
    out_proj_w = init(ks[2], (D, D))
    out_proj_b = init(ks[3], (D,))
    lin1_w = init(ks[4], (D_FF, D))
    lin1_b = init(ks[5], (D_FF,))
    lin2_w = init(ks[6], (D, D_FF))
    lin2_b = init(ks[7], (D,))

    def ln_params(k):
        ka, kb = jax.random.split(k)
        g = (jnp.ones((D,)) + 0.01 * jax.random.normal(ka, (D,))).astype(jnp.float32)
        b = (0.01 * jax.random.normal(kb, (D,))).astype(jnp.float32)
        return g, b

    g1, be1 = ln_params(ks[8])
    g2, be2 = ln_params(ks[9])
    gf, bef = ln_params(ks[10])

    # Packed weights: x @ W convention (pre-transposed).
    w_all = jnp.concatenate([in_proj_w[0:D].T, in_proj_w[D:2 * D].T,
                             in_proj_w[2 * D:3 * D].T, out_proj_w.T], axis=1)   # (D, 4D)
    w1b = jnp.concatenate([lin1_w.T, lin1_b.reshape(1, D_FF)], axis=0)          # (D+1, D_FF)
    w2 = lin2_w.T                                                               # (D_FF, D)
    vecs = jnp.stack([in_proj_b[0:D], in_proj_b[D:2 * D], in_proj_b[2 * D:3 * D],
                      out_proj_b, lin2_b,
                      g1, be1, g2, be2, gf, bef], axis=0)                       # (11, D)
    return (w_all.astype(jnp.float32), w1b.astype(jnp.float32),
            w2.astype(jnp.float32), vecs.astype(jnp.float32))


if __name__ == "__main__":
    B, S, D = 2, 8, D_MODEL
    key = jax.random.PRNGKey(0)
    kx, kp = jax.random.split(key)
    x = jax.random.normal(kx, (B, S, D), dtype=jnp.float32)
    params = make_params(kp)

    out = jax.jit(dummy_encoder_forward)(x, params)
    out = jax.block_until_ready(out)
    assert out.shape == (B, D), out.shape
    assert out.dtype == jnp.float32
    print("KERNEL_OK")
</pallas_src>

<mosaic_0001>
module attributes {stable_mosaic.version = 11 : i64} {
  func.func @encoder_kernel(%arg0: memref<18x8xf32, #tpu.memory_space<vmem>>, %arg1: memref<8x32xf32, #tpu.memory_space<vmem>>, %arg2: memref<9x2048xf32, #tpu.memory_space<vmem>>, %arg3: memref<2048x8xf32, #tpu.memory_space<vmem>>, %arg4: memref<11x8xf32, #tpu.memory_space<vmem>>, %arg5: memref<2x8xf32, #tpu.memory_space<vmem>>) attributes {dimension_semantics = [], scalar_prefetch = 0 : i64, scratch_operands = 0 : i64, tpu.core_type = #tpu.core_type<tc>} {
    %c0 = arith.constant 0 : index
    %c0_0 = arith.constant 0 : index
    %0 = vector.load %arg0[%c0, %c0_0] : memref<18x8xf32, #tpu.memory_space<vmem>>, vector<18x8xf32>
    %c0_1 = arith.constant 0 : index
    %c0_2 = arith.constant 0 : index
    %1 = vector.load %arg1[%c0_1, %c0_2] : memref<8x32xf32, #tpu.memory_space<vmem>>, vector<8x32xf32>
    %c0_3 = arith.constant 0 : index
    %c0_4 = arith.constant 0 : index
    %2 = vector.load %arg4[%c0_3, %c0_4] : memref<11x8xf32, #tpu.memory_space<vmem>>, vector<11x8xf32>
    %3 = vector.extract_strided_slice %2 {offsets = [0, 0], sizes = [1, 8], strides = [1, 1]} : vector<11x8xf32> to vector<1x8xf32>
    %4 = vector.extract_strided_slice %2 {offsets = [1, 0], sizes = [1, 8], strides = [1, 1]} : vector<11x8xf32> to vector<1x8xf32>
    %5 = vector.extract_strided_slice %2 {offsets = [2, 0], sizes = [1, 8], strides = [1, 1]} : vector<11x8xf32> to vector<1x8xf32>
    %6 = vector.extract_strided_slice %2 {offsets = [3, 0], sizes = [1, 8], strides = [1, 1]} : vector<11x8xf32> to vector<1x8xf32>
    %7 = vector.extract_strided_slice %2 {offsets = [4, 0], sizes = [1, 8], strides = [1, 1]} : vector<11x8xf32> to vector<1x8xf32>
    %8 = vector.extract_strided_slice %2 {offsets = [5, 0], sizes = [1, 8], strides = [1, 1]} : vector<11x8xf32> to vector<1x8xf32>
    %9 = vector.extract_strided_slice %2 {offsets = [6, 0], sizes = [1, 8], strides = [1, 1]} : vector<11x8xf32> to vector<1x8xf32>
    %10 = vector.extract_strided_slice %2 {offsets = [7, 0], sizes = [1, 8], strides = [1, 1]} : vector<11x8xf32> to vector<1x8xf32>
    %11 = vector.extract_strided_slice %2 {offsets = [8, 0], sizes = [1, 8], strides = [1, 1]} : vector<11x8xf32> to vector<1x8xf32>
    %12 = vector.extract_strided_slice %2 {offsets = [9, 0], sizes = [1, 8], strides = [1, 1]} : vector<11x8xf32> to vector<1x8xf32>
    %13 = vector.extract_strided_slice %2 {offsets = [10, 0], sizes = [1, 8], strides = [1, 1]} : vector<11x8xf32> to vector<1x8xf32>
    %cst = arith.constant dense<0.000000e+00> : vector<18x32xf32>
    %14 = tpu.matmul %0, %1, %cst {dimension_numbers = #tpu.dot_dimension_numbers<[1], [0], [0], [1], [0, 0, 1, 1], [], []>} : vector<18x8xf32>, vector<8x32xf32>, vector<18x32xf32> -> vector<18x32xf32>
    %15 = vector.extract_strided_slice %14 {offsets = [0, 8], sizes = [16, 8], strides = [1, 1]} : vector<18x32xf32> to vector<16x8xf32>
    %16 = vector.broadcast %4 : vector<1x8xf32> to vector<16x8xf32>
    %17 = arith.addf %15, %16 : vector<16x8xf32>
    %18 = vector.extract_strided_slice %14 {offsets = [0, 16], sizes = [16, 8], strides = [1, 1]} : vector<18x32xf32> to vector<16x8xf32>
    %19 = vector.broadcast %5 : vector<1x8xf32> to vector<16x8xf32>
    %20 = arith.addf %18, %19 : vector<16x8xf32>
    %21 = vector.extract_strided_slice %14 {offsets = [16, 0], sizes = [2, 8], strides = [1, 1]} : vector<18x32xf32> to vector<2x8xf32>
    %22 = vector.broadcast %3 : vector<1x8xf32> to vector<2x8xf32>
    %23 = arith.addf %21, %22 : vector<2x8xf32>
    %24 = vector.extract_strided_slice %0 {offsets = [16, 0], sizes = [2, 8], strides = [1, 1]} : vector<18x8xf32> to vector<2x8xf32>
    %25 = vector.shape_cast %17 : vector<16x8xf32> to vector<2x8x8xf32>
    %26 = vector.shape_cast %20 : vector<16x8xf32> to vector<2x8x8xf32>
    %27 = vector.shape_cast %23 : vector<2x8xf32> to vector<2x1x8xf32>
    %28 = vector.broadcast %27 : vector<2x1x8xf32> to vector<2x8x8xf32>
    %29 = arith.mulf %28, %25 : vector<2x8x8xf32>
    %30 = vector.extract_strided_slice %29 {offsets = [0, 0, 0], sizes = [2, 8, 4], strides = [1, 1, 1]} : vector<2x8x8xf32> to vector<2x8x4xf32>
    %cst_5 = arith.constant dense<0.000000e+00> : vector<2x8xf32>
    %31 = vector.multi_reduction <add>, %30, %cst_5 [2] : vector<2x8x4xf32> to vector<2x8xf32>
    %cst_6 = arith.constant 5.000000e-01 : f32
    %32 = vector.broadcast %cst_6 : f32 to vector<2x8xf32>
    %33 = arith.mulf %31, %32 : vector<2x8xf32>
    %cst_7 = arith.constant dense<0xFF800000> : vector<2xf32>
    %34 = vector.multi_reduction <maximumf>, %33, %cst_7 [1] : vector<2x8xf32> to vector<2xf32>
    %35 = vector.shape_cast %34 : vector<2xf32> to vector<2x1xf32>
    %36 = vector.broadcast %35 : vector<2x1xf32> to vector<2x8xf32>
    %37 = arith.subf %33, %36 : vector<2x8xf32>
    %38 = math.exp %37 : vector<2x8xf32>
    %cst_8 = arith.constant dense<0.000000e+00> : vector<2xf32>
    %39 = vector.multi_reduction <add>, %38, %cst_8 [1] : vector<2x8xf32> to vector<2xf32>
    %40 = vector.shape_cast %39 : vector<2xf32> to vector<2x1xf32>
    %41 = tpu.reciprocal %40 {approx = true} : vector<2x1xf32> -> vector<2x1xf32>
    %42 = vector.broadcast %41 : vector<2x1xf32> to vector<2x8xf32>
    %43 = arith.mulf %38, %42 : vector<2x8xf32>
    %44 = vector.shape_cast %43 : vector<2x8xf32> to vector<2x8x1xf32>
    %45 = vector.extract_strided_slice %26 {offsets = [0, 0, 0], sizes = [2, 8, 4], strides = [1, 1, 1]} : vector<2x8x8xf32> to vector<2x8x4xf32>
    %46 = vector.broadcast %44 : vector<2x8x1xf32> to vector<2x8x4xf32>
    %47 = arith.mulf %46, %45 : vector<2x8x4xf32>
    %cst_9 = arith.constant dense<0.000000e+00> : vector<2x4xf32>
    %48 = vector.multi_reduction <add>, %47, %cst_9 [1] : vector<2x8x4xf32> to vector<2x4xf32>
    %49 = vector.extract_strided_slice %29 {offsets = [0, 0, 4], sizes = [2, 8, 4], strides = [1, 1, 1]} : vector<2x8x8xf32> to vector<2x8x4xf32>
    %cst_10 = arith.constant dense<0.000000e+00> : vector<2x8xf32>
    %50 = vector.multi_reduction <add>, %49, %cst_10 [2] : vector<2x8x4xf32> to vector<2x8xf32>
    %cst_11 = arith.constant 5.000000e-01 : f32
    %51 = vector.broadcast %cst_11 : f32 to vector<2x8xf32>
    %52 = arith.mulf %50, %51 : vector<2x8xf32>
    %cst_12 = arith.constant dense<0xFF800000> : vector<2xf32>
    %53 = vector.multi_reduction <maximumf>, %52, %cst_12 [1] : vector<2x8xf32> to vector<2xf32>
    %54 = vector.shape_cast %53 : vector<2xf32> to vector<2x1xf32>
    %55 = vector.broadcast %54 : vector<2x1xf32> to vector<2x8xf32>
    %56 = arith.subf %52, %55 : vector<2x8xf32>
    %57 = math.exp %56 : vector<2x8xf32>
    %cst_13 = arith.constant dense<0.000000e+00> : vector<2xf32>
    %58 = vector.multi_reduction <add>, %57, %cst_13 [1] : vector<2x8xf32> to vector<2xf32>
    %59 = vector.shape_cast %58 : vector<2xf32> to vector<2x1xf32>
    %60 = tpu.reciprocal %59 {approx = true} : vector<2x1xf32> -> vector<2x1xf32>
    %61 = vector.broadcast %60 : vector<2x1xf32> to vector<2x8xf32>
    %62 = arith.mulf %57, %61 : vector<2x8xf32>
    %63 = vector.shape_cast %62 : vector<2x8xf32> to vector<2x8x1xf32>
    %64 = vector.extract_strided_slice %26 {offsets = [0, 0, 4], sizes = [2, 8, 4], strides = [1, 1, 1]} : vector<2x8x8xf32> to vector<2x8x4xf32>
    %65 = vector.broadcast %63 : vector<2x8x1xf32> to vector<2x8x4xf32>
    %66 = arith.mulf %65, %64 : vector<2x8x4xf32>
    %cst_14 = arith.constant dense<0.000000e+00> : vector<2x4xf32>
    %67 = vector.multi_reduction <add>, %66, %cst_14 [1] : vector<2x8x4xf32> to vector<2x4xf32>
    %68 = tpu.concatenate %48, %67 in 1 : vector<2x4xf32>, vector<2x4xf32> -> vector<2x8xf32>
    %69 = vector.extract_strided_slice %1 {offsets = [0, 24], sizes = [8, 8], strides = [1, 1]} : vector<8x32xf32> to vector<8x8xf32>
    %cst_15 = arith.constant dense<0.000000e+00> : vector<2x8xf32>
    %70 = tpu.matmul %68, %69, %cst_15 {dimension_numbers = #tpu.dot_dimension_numbers<[1], [0], [0], [1], [0, 0, 1, 1], [], []>} : vector<2x8xf32>, vector<8x8xf32>, vector<2x8xf32> -> vector<2x8xf32>
    %71 = vector.broadcast %6 : vector<1x8xf32> to vector<2x8xf32>
    %72 = arith.addf %70, %71 : vector<2x8xf32>
    %73 = arith.addf %24, %72 : vector<2x8xf32>
    %cst_16 = arith.constant dense<0.000000e+00> : vector<2xf32>
    %74 = vector.multi_reduction <add>, %73, %cst_16 [1] : vector<2x8xf32> to vector<2xf32>
    %75 = vector.shape_cast %74 : vector<2xf32> to vector<2x1xf32>
    %cst_17 = arith.constant 8.000000e+00 : f32
    %76 = vector.broadcast %cst_17 : f32 to vector<2x1xf32>
    %77 = arith.divf %75, %76 : vector<2x1xf32>
    %78 = vector.broadcast %77 : vector<2x1xf32> to vector<2x8xf32>
    %79 = arith.subf %73, %78 : vector<2x8xf32>
    %80 = arith.mulf %79, %79 : vector<2x8xf32>
    %cst_18 = arith.constant dense<0.000000e+00> : vector<2xf32>
    %81 = vector.multi_reduction <add>, %80, %cst_18 [1] : vector<2x8xf32> to vector<2xf32>
    %82 = vector.shape_cast %81 : vector<2xf32> to vector<2x1xf32>
    %cst_19 = arith.constant 8.000000e+00 : f32
    %83 = vector.broadcast %cst_19 : f32 to vector<2x1xf32>
    %84 = arith.divf %82, %83 : vector<2x1xf32>
    %cst_20 = arith.constant 9.99999974E-6 : f32
    %85 = vector.broadcast %cst_20 : f32 to vector<2x1xf32>
    %86 = arith.addf %84, %85 : vector<2x1xf32>
    %87 = math.rsqrt %86 : vector<2x1xf32>
    %88 = vector.broadcast %87 : vector<2x1xf32> to vector<2x8xf32>
    %89 = arith.mulf %79, %88 : vector<2x8xf32>
    %90 = vector.broadcast %8 : vector<1x8xf32> to vector<2x8xf32>
    %91 = arith.mulf %89, %90 : vector<2x8xf32>
    %92 = vector.broadcast %9 : vector<1x8xf32> to vector<2x8xf32>
    %93 = arith.addf %91, %92 : vector<2x8xf32>
    %c0_21 = arith.constant 0 : index
    %c0_22 = arith.constant 0 : index
    %94 = vector.load %arg2[%c0_21, %c0_22] : memref<9x2048xf32, #tpu.memory_space<vmem>>, vector<9x2048xf32>
    %95 = vector.extract_strided_slice %94 {offsets = [0, 0], sizes = [8, 2048], strides = [1, 1]} : vector<9x2048xf32> to vector<8x2048xf32>
    %cst_23 = arith.constant dense<0.000000e+00> : vector<2x2048xf32>
    %96 = tpu.matmul %93, %95, %cst_23 {dimension_numbers = #tpu.dot_dimension_numbers<[1], [0], [0], [1], [0, 0, 1, 1], [], []>} : vector<2x8xf32>, vector<8x2048xf32>, vector<2x2048xf32> -> vector<2x2048xf32>
    %97 = vector.extract_strided_slice %94 {offsets = [8, 0], sizes = [1, 2048], strides = [1, 1]} : vector<9x2048xf32> to vector<1x2048xf32>
    %98 = vector.broadcast %97 : vector<1x2048xf32> to vector<2x2048xf32>
    %99 = arith.addf %96, %98 : vector<2x2048xf32>
    %cst_24 = arith.constant 0.000000e+00 : f32
    %100 = vector.broadcast %cst_24 : f32 to vector<2x2048xf32>
    %101 = arith.maximumf %99, %100 : vector<2x2048xf32>
    %c0_25 = arith.constant 0 : index
    %c0_26 = arith.constant 0 : index
    %102 = vector.load %arg3[%c0_25, %c0_26] : memref<2048x8xf32, #tpu.memory_space<vmem>>, vector<2048x8xf32>
    %cst_27 = arith.constant dense<0.000000e+00> : vector<2x8xf32>
    %103 = tpu.matmul %101, %102, %cst_27 {dimension_numbers = #tpu.dot_dimension_numbers<[1], [0], [0], [1], [0, 0, 1, 1], [], []>} : vector<2x2048xf32>, vector<2048x8xf32>, vector<2x8xf32> -> vector<2x8xf32>
    %104 = vector.broadcast %7 : vector<1x8xf32> to vector<2x8xf32>
    %105 = arith.addf %103, %104 : vector<2x8xf32>
    %106 = arith.addf %93, %105 : vector<2x8xf32>
    %cst_28 = arith.constant dense<0.000000e+00> : vector<2xf32>
    %107 = vector.multi_reduction <add>, %106, %cst_28 [1] : vector<2x8xf32> to vector<2xf32>
    %108 = vector.shape_cast %107 : vector<2xf32> to vector<2x1xf32>
    %cst_29 = arith.constant 8.000000e+00 : f32
    %109 = vector.broadcast %cst_29 : f32 to vector<2x1xf32>
    %110 = arith.divf %108, %109 : vector<2x1xf32>
    %111 = vector.broadcast %110 : vector<2x1xf32> to vector<2x8xf32>
    %112 = arith.subf %106, %111 : vector<2x8xf32>
    %113 = arith.mulf %112, %112 : vector<2x8xf32>
    %cst_30 = arith.constant dense<0.000000e+00> : vector<2xf32>
    %114 = vector.multi_reduction <add>, %113, %cst_30 [1] : vector<2x8xf32> to vector<2xf32>
    %115 = vector.shape_cast %114 : vector<2xf32> to vector<2x1xf32>
    %cst_31 = arith.constant 8.000000e+00 : f32
    %116 = vector.broadcast %cst_31 : f32 to vector<2x1xf32>
    %117 = arith.divf %115, %116 : vector<2x1xf32>
    %cst_32 = arith.constant 9.99999974E-6 : f32
    %118 = vector.broadcast %cst_32 : f32 to vector<2x1xf32>
    %119 = arith.addf %117, %118 : vector<2x1xf32>
    %120 = math.rsqrt %119 : vector<2x1xf32>
    %121 = vector.broadcast %120 : vector<2x1xf32> to vector<2x8xf32>
    %122 = arith.mulf %112, %121 : vector<2x8xf32>
    %123 = vector.broadcast %10 : vector<1x8xf32> to vector<2x8xf32>
    %124 = arith.mulf %122, %123 : vector<2x8xf32>
    %125 = vector.broadcast %11 : vector<1x8xf32> to vector<2x8xf32>
    %126 = arith.addf %124, %125 : vector<2x8xf32>
    %cst_33 = arith.constant dense<0.000000e+00> : vector<2xf32>
    %127 = vector.multi_reduction <add>, %126, %cst_33 [1] : vector<2x8xf32> to vector<2xf32>
    %128 = vector.shape_cast %127 : vector<2xf32> to vector<2x1xf32>
    %cst_34 = arith.constant 8.000000e+00 : f32
    %129 = vector.broadcast %cst_34 : f32 to vector<2x1xf32>
    %130 = arith.divf %128, %129 : vector<2x1xf32>
    %131 = vector.broadcast %130 : vector<2x1xf32> to vector<2x8xf32>
    %132 = arith.subf %126, %131 : vector<2x8xf32>
    %133 = arith.mulf %132, %132 : vector<2x8xf32>
    %cst_35 = arith.constant dense<0.000000e+00> : vector<2xf32>
    %134 = vector.multi_reduction <add>, %133, %cst_35 [1] : vector<2x8xf32> to vector<2xf32>
    %135 = vector.shape_cast %134 : vector<2xf32> to vector<2x1xf32>
    %cst_36 = arith.constant 8.000000e+00 : f32
    %136 = vector.broadcast %cst_36 : f32 to vector<2x1xf32>
    %137 = arith.divf %135, %136 : vector<2x1xf32>
    %cst_37 = arith.constant 9.99999974E-6 : f32
    %138 = vector.broadcast %cst_37 : f32 to vector<2x1xf32>
    %139 = arith.addf %137, %138 : vector<2x1xf32>
    %140 = math.rsqrt %139 : vector<2x1xf32>
    %141 = vector.broadcast %140 : vector<2x1xf32> to vector<2x8xf32>
    %142 = arith.mulf %132, %141 : vector<2x8xf32>
    %143 = vector.broadcast %12 : vector<1x8xf32> to vector<2x8xf32>
    %144 = arith.mulf %142, %143 : vector<2x8xf32>
    %145 = vector.broadcast %13 : vector<1x8xf32> to vector<2x8xf32>
    %146 = arith.addf %144, %145 : vector<2x8xf32>
    %c0_38 = arith.constant 0 : index
    %c0_39 = arith.constant 0 : index
    %147 = vector.load %arg5[%c0_38, %c0_39] : memref<2x8xf32, #tpu.memory_space<vmem>>, vector<2x8xf32>
    tpu.vector_store %arg5[%c0_38, %c0_39], %146 {strides = array<i32>} : memref<2x8xf32, #tpu.memory_space<vmem>>, vector<2x8xf32>,
    return
  }
}

</mosaic_0001>

<llo_original>
// kernel: dummy_encoder_forward.1
$region0: #{dummy_encoder_forward.1}
  #allocation0 [shape = 'u32[]', space=smem, size = 0x4, offset = 0x4, fixed_abs, tag = 'smem constant byte address 0x4 - core index']
  #allocation1 [shape = 'u32[144,128]{1,0:T(1,128)}', space=vmem, size = 0x12000, scoped, tag = 'internal scratch']
  %s0 = inlined_call_operand.vmem [shape: f32[18,8], index: 0, kind: input, shape index: {}]
  %s1 = inlined_call_operand.vmem [shape: f32[8,32], index: 1, kind: input, shape index: {}]
  %s2 = inlined_call_operand.vmem [shape: f32[9,2048], index: 2, kind: input, shape index: {}]
  %s3 = inlined_call_operand.vmem [shape: f32[2048,8], index: 3, kind: input, shape index: {}]
  %s4 = inlined_call_operand.vmem [shape: f32[11,8], index: 4, kind: input, shape index: {}]
  %s5 = inlined_call_operand.hbm [shape: f32[2,8], index: 5, kind: output, shape index: {}]
  %s6 = sld [smem:[#allocation0]]
  $region30: #{dummy_encoder_forward.1} parent=0
    _
  %s8 = ssub.s32 1, %s6
  %s9 = scalar_select 0, %s8, %s6
  $region1: #{dummy_encoder_forward.1} parent=0
    #allocation2 [shape = 'u8[1024]{0}', space=vmem, size = 0x400, scoped, tag = 'output window, operand 0, single buffered']
    #allocation3 [shape = 's32[1]{0}', space=sflag, size = 0x4, scoped, tag = 'scoped memory for dummy_encoder_forward.1']
    %10 = vsyncpa [#allocation3], 0
    // Predicated region
    $region2: #{dummy_encoder_forward.1} parent=1 // pred_check
      _
    $region3: #{dummy_encoder_forward.1} parent=1 // pred_check_branch
      %12 = sbr.rel (0) target = $region5
    $region4: #{dummy_encoder_forward.1} parent=1 // pred_region
      _
    $region5: #{dummy_encoder_forward.1} parent=1 // pred_fallthru
      _
    // Predicated region
    $region6: #{dummy_encoder_forward.1} parent=1 // pred_check
      _
    $region7: #{dummy_encoder_forward.1} parent=1 // pred_check_branch
      %14 = sbr.rel (0) target = $region9
    $region8: #{dummy_encoder_forward.1} parent=1 // pred_region
      _
    $region9: #{dummy_encoder_forward.1} parent=1 // pred_fallthru
      _
    // Predicated region
    $region10: #{dummy_encoder_forward.1} parent=1 // pred_check
      _
    $region11: #{dummy_encoder_forward.1} parent=1 // pred_check_branch
      %16 = sbr.rel (0) target = $region13
    $region12: #{dummy_encoder_forward.1} parent=1 // pred_region
      _
    $region13: #{dummy_encoder_forward.1} parent=1 // pred_fallthru
      _
    // Predicated region
    $region14: #{dummy_encoder_forward.1} parent=1 // pred_check
      _
    $region15: #{dummy_encoder_forward.1} parent=1 // pred_check_branch
      %18 = sbr.rel (0) target = $region17
    $region16: #{dummy_encoder_forward.1} parent=1 // pred_region
      _
    $region17: #{dummy_encoder_forward.1} parent=1 // pred_fallthru
      _
    // Predicated region
    $region18: #{dummy_encoder_forward.1} parent=1 // pred_check
      _
    $region19: #{dummy_encoder_forward.1} parent=1 // pred_check_branch
      %20 = sbr.rel (0) target = $region21
    $region20: #{dummy_encoder_forward.1} parent=1 // pred_region
      _
    $region21: #{dummy_encoder_forward.1} parent=1 // pred_fallthru
      _
    %v21 = vld [vmem:[%s0] sm:$0xff]
    %v22 = vld [vmem:[%s0 + $0x8] sm:$0xff]
    %v23 = vld [vmem:[%s0 + $0x10] sm:$0x3]
    %v24 = vld [vmem:[%s1] sm:$0xff]
    %v25 = vld [vmem:[%s4] sm:$0xff]
    %v26 = vld [vmem:[%s4 + $0x8] sm:$0x7]
    %vm27 = vcmask 64512
    %v29 = vsel %vm27, %v21, 0
    %v32 = vsel %vm27, %v22, 0
    %v35 = vsel %vm27, %v23, 0
    %37 = vmatprep.subr.mxu0 0.0
    %38 = vmatpush1.msra.mxu0 %v24
    %39 = vmatprep.subr.mxu0 0.0
    %40 = vmatpush1.msra.mxu0 0.0
    %41 = vmatprep.subr.mxu0 0.0
    %42 = vmatpush1.msra.mxu0 0.0
    %43 = vmatprep.subr.mxu0 0.0
    %44 = vmatpush1.msra.mxu0 0.0
    %45 = vmatprep.subr.mxu0 0.0
    %46 = vmatpush1.msra.mxu0 0.0
    %47 = vmatprep.subr.mxu0 0.0
    %48 = vmatpush1.msra.mxu0 0.0
    %49 = vmatprep.subr.mxu0 0.0
    %50 = vmatpush1.msra.mxu0 0.0
    %51 = vmatprep.subr.mxu0 0.0
    %52 = vmatpush1.msra.mxu0 0.0
    %53 = vmatprep.subr.mxu0 0.0
    %54 = vmatpush1.msra.mxu0 0.0
    %55 = vmatprep.subr.mxu0 0.0
    %56 = vmatpush1.msra.mxu0 0.0
    %57 = vmatprep.subr.mxu0 0.0
    %58 = vmatpush1.msra.mxu0 0.0
    %59 = vmatprep.subr.mxu0 0.0
    %60 = vmatpush1.msra.mxu0 0.0
    %61 = vmatprep.subr.mxu0 0.0
    %62 = vmatpush1.msra.mxu0 0.0
    %63 = vmatprep.subr.mxu0 0.0
    %64 = vmatpush1.msra.mxu0 0.0
    %65 = vmatprep.subr.mxu0 0.0
    %66 = vmatpush1.msra.mxu0 0.0
    %67 = vmatprep.subr.mxu0 0.0
    %68 = vmatpush1.msra.mxu0 0.0
    %69 = vmatprep.subr.mxu0 0.0
    %70 = vmatpush1.msra.mxu0 0.0
    %71 = vmatprep.subr.mxu0 0.0
    %72 = vmatpush1.msra.mxu0 0.0
    %73 = vmatprep.subr.mxu0 0.0
    %74 = vmatpush1.msra.mxu0 0.0
    %75 = vmatprep.subr.mxu0 0.0
    %76 = vmatpush1.msra.mxu0 0.0
    %77 = vmatprep.subr.mxu0 0.0
    %78 = vmatpush1.msra.mxu0 0.0
    %79 = vmatprep.subr.mxu0 0.0
    %80 = vmatpush1.msra.mxu0 0.0
    %81 = vmatprep.subr.mxu0 0.0
    %82 = vmatpush1.msra.mxu0 0.0
    %83 = vmatprep.subr.mxu0 0.0
    %84 = vmatpush1.msra.mxu0 0.0
    %85 = vmatprep.subr.mxu0 0.0
    %86 = vmatpush1.msra.mxu0 0.0
    %87 = vmatprep.subr.mxu0 0.0
    %88 = vmatpush1.msra.mxu0 0.0
    %89 = vmatprep.subr.mxu0 0.0
    %90 = vmatpush1.msra.mxu0 0.0
    %91 = vmatprep.subr.mxu0 0.0
    %92 = vmatpush1.msra.mxu0 0.0
    %93 = vmatprep.subr.mxu0 0.0
    %94 = vmatpush1.msra.mxu0 0.0
    %95 = vmatprep.subr.mxu0 0.0
    %96 = vmatpush1.msra.mxu0 0.0
    %97 = vmatprep.subr.mxu0 0.0
    %98 = vmatpush1.msra.mxu0 0.0
    %99 = vmatprep.subr.mxu0 0.0
    %100 = vmatpush1.msra.mxu0 0.0
    %101 = vmatprep.mubr.f32.mxu0 0.0
    %102 = vmatmul.mubr.f32.gmra.mrb[0].mxu0 %v29
    %v103 = vpop.f32.mrb[0].mxu0
    %v104 = vadd.f32 0.0, %v103
    %v105 = vpop.f32.mrb[0].mxu0
    %106 = vmatprep.mubr.f32.mxu0 0.0
    %107 = vmatmul.mubr.f32.gmra.mrb[0].mxu0 %v32
    %v108 = vpop.f32.mrb[0].mxu0
    %v109 = vadd.f32 0.0, %v108
    %v110 = vpop.f32.mrb[0].mxu0
    %111 = vmatprep.mubr.f32.mxu0 0.0
    %112 = vmatmul.mubr.f32.gmra.mrb[0].mxu0 %v35
    %v113 = vpop.f32.mrb[0].mxu0
    %v114 = vadd.f32 0.0, %v113
    %v115 = vpop.f32.mrb[0].mxu0
    %116 = vdwg.mxu0
    %v117 = vlaneseq
    %v118 = vshrl.u32 %v117, 7
    %v119 = vsub.s32 1, %v118
    %v120 = vrot.slane %v25, %v119
    %122 = vrot.lane.b32.xlu0 %v120, 8
    %v123 = vpop.permute.xlu0 %122
    %v125 = vadd.f32 %v104, %v123
    %v126 = vadd.f32 %v109, %v123
    %v127 = vlaneseq
    %v128 = vshrl.u32 %v127, 7
    %v129 = vsub.s32 2, %v128
    %v130 = vrot.slane %v25, %v129
    %132 = vrot.lane.b32.xlu0 %v130, 16
    %v133 = vpop.permute.xlu0 %132
    %v135 = vadd.f32 %v104, %v133
    %v136 = vadd.f32 %v109, %v133
    %v137 = vlaneseq
    %v138 = vshrl.u32 %v137, 7
    %v139 = vsub.s32 0, %v138
    %v140 = vrot.slane %v25, %v139
    %v141 = vadd.f32 %v114, %v140
    %v144 = vunpack.c.l.s4 1966171168
    %v145 = vunpack.c.0.s8 %v144
    %v146 = vlaneseq
    %v147 = vshrl.u32 %v146, 7
    %v148 = vsub.s32 %v145, %v147
    %v149 = vrot.slane %v141, %v148
    %v150 = vcombine.high %v149, %v149
    %v152 = vunpack.c.l.s4 1966171168
    %v153 = vunpack.c.0.s8 %v152
    %v154 = vlaneseq
    %v155 = vshrl.u32 %v154, 7
    %v156 = vsub.s32 %v153, %v155
    %v157 = vrot.slane %v149, %v156
    %v159 = vunpack.c.l.s4 1966171168
    %v160 = vunpack.c.0.s8 %v159
    %v161 = vlaneseq
    %v162 = vshrl.u32 %v161, 7
    %v163 = vsub.s32 %v160, %v162
    %v164 = vrot.slane %v150, %v163
    %v165 = vlaneseq
    %v166 = vshrl.u32 %v165, 7
    %v167 = vsub.s32 0, %v166
    %v168 = vrot.slane %v157, %v167
    %v169 = vlaneseq
    %v170 = vshrl.u32 %v169, 7
    %v171 = vsub.s32 0, %v170
    %v172 = vrot.slane %v164, %v171
    %177 = vrot.lane.b32.xlu0 %v125, 120
    %v178 = vpop.permute.xlu0 %177
    %179 = vrot.lane.b32.xlu0 %v126, 120
    %v180 = vpop.permute.xlu0 %179
    %v183 = vmul.f32 %v168, %v178
    %v184 = vmul.f32 %v172, %v180
    %vm185 = vcmask 31744
    %v186 = vsel %vm185, %v183, 0.0
    %187 = vadd.xlane.f32.xlu0 %v186
    %v188 = vpop.xlane.xlu0 %187
    %v189 = vsel %vm185, %v184, 0.0
    %190 = vadd.xlane.f32.xlu0 %v189
    %v191 = vpop.xlane.xlu0 %190
    %v192 = vmul.f32 %v188, 0.5
    %v193 = vmul.f32 %v191, 0.5
    %v196 = vlaneseq
    %v197 = vand.u32 %v196, 127
    %v198 = vlaneseq
    %v199 = vshrl.u32 %v198, 7
    %v200 = vsub.s32 %v197, %v199
    %v201 = vrot.slane %v192, %v200
    %v202 = vlaneseq
    %v203 = vshrl.u32 %v202, 7
    %v204 = vsub.s32 %v197, %v203
    %v205 = vrot.slane %v193, %v204
    %vm206 = vcmask 1041409
    %v207 = vsel %vm206, %v205, %v201
    %vm209 = vcmask 58368
    %v210 = vsel %vm209, %v207, -inf
    %211 = vmax.xlane.f32.xlu0 %v210
    %v212 = vpop.xlane.xlu0 %211
    %v214 = vlaneseq
    %v215 = vshrl.u32 %v214, 7
    %v216 = vsub.s32 0, %v215
    %v217 = vrot.slane %v212, %v216
    %v218 = vlaneseq
    %v219 = vshrl.u32 %v218, 7
    %v220 = vsub.s32 1, %v219
    %v221 = vrot.slane %v212, %v220
    %v224 = vsub.f32 %v192, %v217
    %v225 = vsub.f32 %v193, %v221
    %v226 = vmul.f32 %v224, 1.442695
    %v227 = vpow.pop %v226
    %v228 = vmul.f32 %v225, 1.442695
    %v229 = vpow.pop %v228
    %232 = vset.pattern.permute.xlu0 0
    %233 = vperm.xlu0 %232, %v227
    %v234 = vpop.permute.xlu0 %233
    %235 = vset.pattern.permute.xlu0 0
    %236 = vperm.xlu0 %235, %v229
    %v237 = vpop.permute.xlu0 %236
    %v238 = vlaneseq
    %v239 = vshrl.u32 %v238, 7
    %v240 = vsub.s32 %v197, %v239
    %v241 = vrot.slane %v234, %v240
    %v242 = vlaneseq
    %v243 = vshrl.u32 %v242, 7
    %v244 = vsub.s32 %v197, %v243
    %v245 = vrot.slane %v237, %v244
    %v246 = vsel %vm206, %v245, %v241
    %v248 = vsel %vm209, %v246, 0.0
    %249 = vadd.xlane.f32.xlu0 %v248
    %v250 = vpop.xlane.xlu0 %249
    %v251 = vrcp.pop %v250
    %v253 = vlaneseq
    %v254 = vshrl.u32 %v253, 7
    %v255 = vsub.s32 0, %v254
    %v256 = vrot.slane %v251, %v255
    %v257 = vlaneseq
    %v258 = vshrl.u32 %v257, 7
    %v259 = vsub.s32 1, %v258
    %v260 = vrot.slane %v251, %v259
    %v263 = vmul.f32 %v227, %v256
    %v264 = vmul.f32 %v229, %v260
    %266 = vset.pattern.permute.xlu0 0
    %267 = vperm.xlu0 %266, %v263
    %v268 = vpop.permute.xlu0 %267
    %271 = vset.pattern.permute.xlu0 0
    %272 = vperm.xlu0 %271, %v264
    %v273 = vpop.permute.xlu0 %272
    %v275 = vmul.f32 %v268, %v135
    %v276 = vmul.f32 %v273, %v136
    %vm277 = vcmask 162944
    %v278 = vsel %vm277, %v275, 0.0
    %v279 = vrot.slane %v278, 4
    %v280 = vadd.f32 %v278, %v279
    %v281 = vrot.slane %v280, 2
    %v282 = vadd.f32 %v280, %v281
    %v283 = vrot.slane %v282, 1
    %v284 = vadd.f32 %v282, %v283
    %v285 = vsel %vm277, %v276, 0.0
    %v286 = vrot.slane %v285, 4
    %v287 = vadd.f32 %v285, %v286
    %v288 = vrot.slane %v287, 2
    %v289 = vadd.f32 %v287, %v288
    %v290 = vrot.slane %v289, 1
    %v291 = vadd.f32 %v289, %v290
    %294 = vrot.lane.b32.xlu0 %v183, 124
    %v295 = vpop.permute.xlu0 %294
    %296 = vrot.lane.b32.xlu0 %v184, 124
    %v297 = vpop.permute.xlu0 %296
    %v300 = vsel %vm185, %v295, 0.0
    %301 = vadd.xlane.f32.xlu0 %v300
    %v302 = vpop.xlane.xlu0 %301
    %v303 = vsel %vm185, %v297, 0.0
    %304 = vadd.xlane.f32.xlu0 %v303
    %v305 = vpop.xlane.xlu0 %304
    %v306 = vmul.f32 %v302, 0.5
    %v307 = vmul.f32 %v305, 0.5
    %v310 = vlaneseq
    %v311 = vshrl.u32 %v310, 7
    %v312 = vsub.s32 %v197, %v311
    %v313 = vrot.slane %v306, %v312
    %v314 = vlaneseq
    %v315 = vshrl.u32 %v314, 7
    %v316 = vsub.s32 %v197, %v315
    %v317 = vrot.slane %v307, %v316
    %v318 = vsel %vm206, %v317, %v313
    %v320 = vsel %vm209, %v318, -inf
    %321 = vmax.xlane.f32.xlu0 %v320
    %v322 = vpop.xlane.xlu0 %321
    %v324 = vlaneseq
    %v325 = vshrl.u32 %v324, 7
    %v326 = vsub.s32 0, %v325
    %v327 = vrot.slane %v322, %v326
    %v328 = vlaneseq
    %v329 = vshrl.u32 %v328, 7
    %v330 = vsub.s32 1, %v329
    %v331 = vrot.slane %v322, %v330
    %v334 = vsub.f32 %v306, %v327
    %v335 = vsub.f32 %v307, %v331
    %v336 = vmul.f32 %v334, 1.442695
    %v337 = vpow.pop %v336
    %v338 = vmul.f32 %v335, 1.442695
    %v339 = vpow.pop %v338
    %342 = vset.pattern.permute.xlu0 0
    %343 = vperm.xlu0 %342, %v337
    %v344 = vpop.permute.xlu0 %343
    %345 = vset.pattern.permute.xlu0 0
    %346 = vperm.xlu0 %345, %v339
    %v347 = vpop.permute.xlu0 %346
    %v348 = vlaneseq
    %v349 = vshrl.u32 %v348, 7
    %v350 = vsub.s32 %v197, %v349
    %v351 = vrot.slane %v344, %v350
    %v352 = vlaneseq
    %v353 = vshrl.u32 %v352, 7
    %v354 = vsub.s32 %v197, %v353
    %v355 = vrot.slane %v347, %v354
    %v356 = vsel %vm206, %v355, %v351
    %v358 = vsel %vm209, %v356, 0.0
    %359 = vadd.xlane.f32.xlu0 %v358
    %v360 = vpop.xlane.xlu0 %359
    %v361 = vrcp.pop %v360
    %v363 = vlaneseq
    %v364 = vshrl.u32 %v363, 7
    %v365 = vsub.s32 0, %v364
    %v366 = vrot.slane %v361, %v365
    %v367 = vlaneseq
    %v368 = vshrl.u32 %v367, 7
    %v369 = vsub.s32 1, %v368
    %v370 = vrot.slane %v361, %v369
    %v373 = vmul.f32 %v337, %v366
    %v374 = vmul.f32 %v339, %v370
    %376 = vset.pattern.permute.xlu0 0
    %377 = vperm.xlu0 %376, %v373
    %v378 = vpop.permute.xlu0 %377
    %381 = vset.pattern.permute.xlu0 0
    %382 = vperm.xlu0 %381, %v374
    %v383 = vpop.permute.xlu0 %382
    %v385 = vmul.f32 %v378, %v135
    %v386 = vmul.f32 %v383, %v136
    %vm387 = vcmask 195744
    %v388 = vsel %vm387, %v385, 0.0
    %v389 = vrot.slane %v388, 4
    %v390 = vadd.f32 %v388, %v389
    %v391 = vrot.slane %v390, 2
    %v392 = vadd.f32 %v390, %v391
    %v393 = vrot.slane %v392, 1
    %v394 = vadd.f32 %v392, %v393
    %v395 = vsel %vm387, %v386, 0.0
    %v396 = vrot.slane %v395, 4
    %v397 = vadd.f32 %v395, %v396
    %v398 = vrot.slane %v397, 2
    %v399 = vadd.f32 %v397, %v398
    %v400 = vrot.slane %v399, 1
    %v401 = vadd.f32 %v399, %v400
    %v404 = vsel %vm206, %v291, %v284
    %405 = vrot.lane.b32.xlu0 %v404, 112
    %v406 = vpop.permute.xlu0 %405
    %v410 = vsel %vm206, %v401, %v394
    %411 = vrot.lane.b32.xlu0 %v410, 112
    %v412 = vpop.permute.xlu0 %411
    %v414 = vsel %vm185, %v406, %v412
    %v415 = vlaneseq
    %v416 = vshrl.u32 %v415, 7
    %v417 = vsub.s32 3, %v416
    %v418 = vrot.slane %v25, %v417
    %420 = vrot.lane.b32.xlu0 %v24, 104
    %v421 = vpop.permute.xlu0 %420
    %v424 = vsel %vm27, %v414, 0
    %426 = vmatprep.subr.mxu0 0.0
    %427 = vmatpush1.msra.mxu0 %v421
    %428 = vmatprep.subr.mxu0 0.0
    %429 = vmatpush1.msra.mxu0 0.0
    %430 = vmatprep.subr.mxu0 0.0
    %431 = vmatpush1.msra.mxu0 0.0
    %432 = vmatprep.subr.mxu0 0.0
    %433 = vmatpush1.msra.mxu0 0.0
    %434 = vmatprep.subr.mxu0 0.0
    %435 = vmatpush1.msra.mxu0 0.0
    %436 = vmatprep.subr.mxu0 0.0
    %437 = vmatpush1.msra.mxu0 0.0
    %438 = vmatprep.subr.mxu0 0.0
    %439 = vmatpush1.msra.mxu0 0.0
    %440 = vmatprep.subr.mxu0 0.0
    %441 = vmatpush1.msra.mxu0 0.0
    %442 = vmatprep.subr.mxu0 0.0
    %443 = vmatpush1.msra.mxu0 0.0
    %444 = vmatprep.subr.mxu0 0.0
    %445 = vmatpush1.msra.mxu0 0.0
    %446 = vmatprep.subr.mxu0 0.0
    %447 = vmatpush1.msra.mxu0 0.0
    %448 = vmatprep.subr.mxu0 0.0
    %449 = vmatpush1.msra.mxu0 0.0
    %450 = vmatprep.subr.mxu0 0.0
    %451 = vmatpush1.msra.mxu0 0.0
    %452 = vmatprep.subr.mxu0 0.0
    %453 = vmatpush1.msra.mxu0 0.0
    %454 = vmatprep.subr.mxu0 0.0
    %455 = vmatpush1.msra.mxu0 0.0
    %456 = vmatprep.subr.mxu0 0.0
    %457 = vmatpush1.msra.mxu0 0.0
    %458 = vmatprep.subr.mxu0 0.0
    %459 = vmatpush1.msra.mxu0 0.0
    %460 = vmatprep.subr.mxu0 0.0
    %461 = vmatpush1.msra.mxu0 0.0
    %462 = vmatprep.subr.mxu0 0.0
    %463 = vmatpush1.msra.mxu0 0.0
    %464 = vmatprep.subr.mxu0 0.0
    %465 = vmatpush1.msra.mxu0 0.0
    %466 = vmatprep.subr.mxu0 0.0
    %467 = vmatpush1.msra.mxu0 0.0
    %468 = vmatprep.subr.mxu0 0.0
    %469 = vmatpush1.msra.mxu0 0.0
    %470 = vmatprep.subr.mxu0 0.0
    %471 = vmatpush1.msra.mxu0 0.0
    %472 = vmatprep.subr.mxu0 0.0
    %473 = vmatpush1.msra.mxu0 0.0
    %474 = vmatprep.subr.mxu0 0.0
    %475 = vmatpush1.msra.mxu0 0.0
    %476 = vmatprep.subr.mxu0 0.0
    %477 = vmatpush1.msra.mxu0 0.0
    %478 = vmatprep.subr.mxu0 0.0
    %479 = vmatpush1.msra.mxu0 0.0
    %480 = vmatprep.subr.mxu0 0.0
    %481 = vmatpush1.msra.mxu0 0.0
    %482 = vmatprep.subr.mxu0 0.0
    %483 = vmatpush1.msra.mxu0 0.0
    %484 = vmatprep.subr.mxu0 0.0
    %485 = vmatpush1.msra.mxu0 0.0
    %486 = vmatprep.subr.mxu0 0.0
    %487 = vmatpush1.msra.mxu0 0.0
    %488 = vmatprep.subr.mxu0 0.0
    %489 = vmatpush1.msra.mxu0 0.0
    %490 = vmatprep.mubr.f32.mxu0 0.0
    %491 = vmatmul.mubr.f32.gmra.mrb[0].mxu0 %v424
    %v492 = vpop.f32.mrb[0].mxu0
    %v493 = vadd.f32 %v418, %v492
    %v494 = vpop.f32.mrb[0].mxu0
    %495 = vdwg.mxu0
    %v496 = vadd.f32 %v23, %v493
    %v497 = vsel %vm209, %v496, 0.0
    %498 = vadd.xlane.f32.xlu0 %v497
    %v499 = vpop.xlane.xlu0 %498
    %v500 = vrcp.pop 8.0
    %v501 = vmul.f32 %v499, %v500
    %v502 = vsub.f32 %v496, %v501
    %v503 = vmul.f32 %v502, %v502
    %v504 = vsel %vm209, %v503, 0.0
    %505 = vadd.xlane.f32.xlu0 %v504
    %v506 = vpop.xlane.xlu0 %505
    %v507 = vmul.f32 %v506, %v500
    %v508 = vadd.f32 %v507, 1e-05
    %v509 = vrsqrt.pop %v508
    %v510 = vmul.f32 %v502, %v509
    %v511 = vlaneseq
    %v512 = vshrl.u32 %v511, 7
    %v513 = vsub.s32 5, %v512
    %v514 = vrot.slane %v25, %v513
    %v515 = vmul.f32 %v510, %v514
    %v516 = vlaneseq
    %v517 = vshrl.u32 %v516, 7
    %v518 = vsub.s32 6, %v517
    %v519 = vrot.slane %v25, %v518
    %v520 = vadd.f32 %v515, %v519
    %v521 = vld [vmem:[%s2] sm:$0xff]
    %v522 = vld [vmem:[%s2 + $0x8] sm:$0xff]
    %v523 = vld [vmem:[%s2 + $0x10] sm:$0xff]
    %v524 = vld [vmem:[%s2 + $0x18] sm:$0xff]
    %v525 = vld [vmem:[%s2 + $0x20] sm:$0xff]
    %v526 = vld [vmem:[%s2 + $0x28] sm:$0xff]
    %v527 = vld [vmem:[%s2 + $0x30] sm:$0xff]
    %v528 = vld [vmem:[%s2 + $0x38] sm:$0xff]
    %v529 = vld [vmem:[%s2 + $0x40] sm:$0xff]
    %v530 = vld [vmem:[%s2 + $0x48] sm:$0xff]
    %v531 = vld [vmem:[%s2 + $0x50] sm:$0xff]
    %v532 = vld [vmem:[%s2 + $0x58] sm:$0xff]
    %v533 = vld [vmem:[%s2 + $0x60] sm:$0xff]
    %v534 = vld [vmem:[%s2 + $0x68] sm:$0xff]
    %v535 = vld [vmem:[%s2 + $0x70] sm:$0xff]
    %v536 = vld [vmem:[%s2 + $0x78] sm:$0xff]
    %v537 = vld [vmem:[%s2 + $0x80] sm:$0x1]
    %v538 = vld [vmem:[%s2 + $0x88] sm:$0x1]
    %v539 = vld [vmem:[%s2 + $0x90] sm:$0x1]
    %v540 = vld [vmem:[%s2 + $0x98] sm:$0x1]
    %v541 = vld [vmem:[%s2 + $0xa0] sm:$0x1]
    %v542 = vld [vmem:[%s2 + $0xa8] sm:$0x1]
    %v543 = vld [vmem:[%s2 + $0xb0] sm:$0x1]
    %v544 = vld [vmem:[%s2 + $0xb8] sm:$0x1]
    %v545 = vld [vmem:[%s2 + $0xc0] sm:$0x1]
    %v546 = vld [vmem:[%s2 + $0xc8] sm:$0x1]
    %v547 = vld [vmem:[%s2 + $0xd0] sm:$0x1]
    %v548 = vld [vmem:[%s2 + $0xd8] sm:$0x1]
    %v549 = vld [vmem:[%s2 + $0xe0] sm:$0x1]
    %v550 = vld [vmem:[%s2 + $0xe8] sm:$0x1]
    %v551 = vld [vmem:[%s2 + $0xf0] sm:$0x1]
    %v552 = vld [vmem:[%s2 + $0xf8] sm:$0x1]
    %v553 = vlaneseq
    %v554 = vshrl.u32 %v553, 7
    %v555 = vsub.s32 0, %v554
    %v556 = vrot.slane %v537, %v555
    %v557 = vlaneseq
    %v558 = vshrl.u32 %v557, 7
    %v559 = vsub.s32 0, %v558
    %v560 = vrot.slane %v538, %v559
    %v561 = vlaneseq
    %v562 = vshrl.u32 %v561, 7
    %v563 = vsub.s32 0, %v562
    %v564 = vrot.slane %v539, %v563
    %v565 = vlaneseq
    %v566 = vshrl.u32 %v565, 7
    %v567 = vsub.s32 0, %v566
    %v568 = vrot.slane %v540, %v567
    %v569 = vlaneseq
    %v570 = vshrl.u32 %v569, 7
    %v571 = vsub.s32 0, %v570
    %v572 = vrot.slane %v541, %v571
    %v573 = vlaneseq
    %v574 = vshrl.u32 %v573, 7
    %v575 = vsub.s32 0, %v574
    %v576 = vrot.slane %v542, %v575
    %v577 = vlaneseq
    %v578 = vshrl.u32 %v577, 7
    %v579 = vsub.s32 0, %v578
    %v580 = vrot.slane %v543, %v579
    %v581 = vlaneseq
    %v582 = vshrl.u32 %v581, 7
    %v583 = vsub.s32 0, %v582
    %v584 = vrot.slane %v544, %v583
    %v585 = vlaneseq
    %v586 = vshrl.u32 %v585, 7
    %v587 = vsub.s32 0, %v586
    %v588 = vrot.slane %v545, %v587
    %v589 = vlaneseq
    %v590 = vshrl.u32 %v589, 7
    %v591 = vsub.s32 0, %v590
    %v592 = vrot.slane %v546, %v591
    %v593 = vlaneseq
    %v594 = vshrl.u32 %v593, 7
    %v595 = vsub.s32 0, %v594
    %v596 = vrot.slane %v547, %v595
    %v597 = vlaneseq
    %v598 = vshrl.u32 %v597, 7
    %v599 = vsub.s32 0, %v598
    %v600 = vrot.slane %v548, %v599
    %v601 = vlaneseq
    %v602 = vshrl.u32 %v601, 7
    %v603 = vsub.s32 0, %v602
    %v604 = vrot.slane %v549, %v603
    %v605 = vlaneseq
    %v606 = vshrl.u32 %v605, 7
    %v607 = vsub.s32 0, %v606
    %v608 = vrot.slane %v550, %v607
    %v609 = vlaneseq
    %v610 = vshrl.u32 %v609, 7
    %v611 = vsub.s32 0, %v610
    %v612 = vrot.slane %v551, %v611
    %v613 = vlaneseq
    %v614 = vshrl.u32 %v613, 7
    %v615 = vsub.s32 0, %v614
    %v616 = vrot.slane %v552, %v615
    %v618 = vsel %vm27, %v520, 0
    %620 = vmatprep.subr.mxu0 %v522
    %621 = vmatpush1.msra.mxu0 %v521
    %622 = vmatprep.subr.mxu0 0.0
    %623 = vmatpush1.msra.mxu0 0.0
    %624 = vmatprep.subr.mxu0 0.0
    %625 = vmatpush1.msra.mxu0 0.0
    %626 = vmatprep.subr.mxu0 0.0
    %627 = vmatpush1.msra.mxu0 0.0
    %628 = vmatprep.subr.mxu0 0.0
    %629 = vmatpush1.msra.mxu0 0.0
    %630 = vmatprep.subr.mxu0 0.0
    %631 = vmatpush1.msra.mxu0 0.0
    %632 = vmatprep.subr.mxu0 0.0
    %633 = vmatpush1.msra.mxu0 0.0
    %634 = vmatprep.subr.mxu0 0.0
    %635 = vmatpush1.msra.mxu0 0.0
    %636 = vmatprep.subr.mxu0 0.0
    %637 = vmatpush1.msra.mxu0 0.0
    %638 = vmatprep.subr.mxu0 0.0
    %639 = vmatpush1.msra.mxu0 0.0
    %640 = vmatprep.subr.mxu0 0.0
    %641 = vmatpush1.msra.mxu0 0.0
    %642 = vmatprep.subr.mxu0 0.0
    %643 = vmatpush1.msra.mxu0 0.0
    %644 = vmatprep.subr.mxu0 0.0
    %645 = vmatpush1.msra.mxu0 0.0
    %646 = vmatprep.subr.mxu0 0.0
    %647 = vmatpush1.msra.mxu0 0.0
    %648 = vmatprep.subr.mxu0 0.0
    %649 = vmatpush1.msra.mxu0 0.0
    %650 = vmatprep.subr.mxu0 0.0
    %651 = vmatpush1.msra.mxu0 0.0
    %652 = vmatprep.subr.mxu0 0.0
    %653 = vmatpush1.msra.mxu0 0.0
    %654 = vmatprep.subr.mxu0 0.0
    %655 = vmatpush1.msra.mxu0 0.0
    %656 = vmatprep.subr.mxu0 0.0
    %657 = vmatpush1.msra.mxu0 0.0
    %658 = vmatprep.subr.mxu0 0.0
    %659 = vmatpush1.msra.mxu0 0.0
    %660 = vmatprep.subr.mxu0 0.0
    %661 = vmatpush1.msra.mxu0 0.0
    %662 = vmatprep.subr.mxu0 0.0
    %663 = vmatpush1.msra.mxu0 0.0
    %664 = vmatprep.subr.mxu0 0.0
    %665 = vmatpush1.msra.mxu0 0.0
    %666 = vmatprep.subr.mxu0 0.0
    %667 = vmatpush1.msra.mxu0 0.0
    %668 = vmatprep.subr.mxu0 0.0
    %669 = vmatpush1.msra.mxu0 0.0
    %670 = vmatprep.subr.mxu0 0.0
    %671 = vmatpush1.msra.mxu0 0.0
    %672 = vmatprep.subr.mxu0 0.0
    %673 = vmatpush1.msra.mxu0 0.0
    %674 = vmatprep.subr.mxu0 0.0
    %675 = vmatpush1.msra.mxu0 0.0
    %676 = vmatprep.subr.mxu0 0.0
    %677 = vmatpush1.msra.mxu0 0.0
    %678 = vmatprep.subr.mxu0 0.0
    %679 = vmatpush1.msra.mxu0 0.0
    %680 = vmatprep.subr.mxu0 0.0
    %681 = vmatpush1.msra.mxu0 0.0
    %682 = vmatprep.subr.mxu0 0.0
    %683 = vmatpush1.msra.mxu0 0.0
    %684 = vmatprep.mubr.f32.mxu0 0.0
    %685 = vmatmul.mubr.f32.gmra.mrb[0].mxu0 %v618
    %v686 = vpop.f32.mrb[0].mxu0
    %v687 = vadd.f32 %v556, %v686
    %v688 = vpop.f32.mrb[0].mxu0
    %v689 = vadd.f32 %v560, %v688
    %690 = vdwg.mxu0
    %691 = vmatprep.subr.mxu0 %v524
    %692 = vmatpush1.msra.mxu0 %v523
    %693 = vmatprep.subr.mxu0 0.0
    %694 = vmatpush1.msra.mxu0 0.0
    %695 = vmatprep.subr.mxu0 0.0
    %696 = vmatpush1.msra.mxu0 0.0
    %697 = vmatprep.subr.mxu0 0.0
    %698 = vmatpush1.msra.mxu0 0.0
    %699 = vmatprep.subr.mxu0 0.0
    %700 = vmatpush1.msra.mxu0 0.0
    %701 = vmatprep.subr.mxu0 0.0
    %702 = vmatpush1.msra.mxu0 0.0
    %703 = vmatprep.subr.mxu0 0.0
    %704 = vmatpush1.msra.mxu0 0.0
    %705 = vmatprep.subr.mxu0 0.0
    %706 = vmatpush1.msra.mxu0 0.0
    %707 = vmatprep.subr.mxu0 0.0
    %708 = vmatpush1.msra.mxu0 0.0
    %709 = vmatprep.subr.mxu0 0.0
    %710 = vmatpush1.msra.mxu0 0.0
    %711 = vmatprep.subr.mxu0 0.0
    %712 = vmatpush1.msra.mxu0 0.0
    %713 = vmatprep.subr.mxu0 0.0
    %714 = vmatpush1.msra.mxu0 0.0
    %715 = vmatprep.subr.mxu0 0.0
    %716 = vmatpush1.msra.mxu0 0.0
    %717 = vmatprep.subr.mxu0 0.0
    %718 = vmatpush1.msra.mxu0 0.0
    %719 = vmatprep.subr.mxu0 0.0
    %720 = vmatpush1.msra.mxu0 0.0
    %721 = vmatprep.subr.mxu0 0.0
    %722 = vmatpush1.msra.mxu0 0.0
    %723 = vmatprep.subr.mxu0 0.0
    %724 = vmatpush1.msra.mxu0 0.0
    %725 = vmatprep.subr.mxu0 0.0
    %726 = vmatpush1.msra.mxu0 0.0
    %727 = vmatprep.subr.mxu0 0.0
    %728 = vmatpush1.msra.mxu0 0.0
    %729 = vmatprep.subr.mxu0 0.0
    %730 = vmatpush1.msra.mxu0 0.0
    %731 = vmatprep.subr.mxu0 0.0
    %732 = vmatpush1.msra.mxu0 0.0
    %733 = vmatprep.subr.mxu0 0.0
    %734 = vmatpush1.msra.mxu0 0.0
    %735 = vmatprep.subr.mxu0 0.0
    %736 = vmatpush1.msra.mxu0 0.0
    %737 = vmatprep.subr.mxu0 0.0
    %738 = vmatpush1.msra.mxu0 0.0
    %739 = vmatprep.subr.mxu0 0.0
    %740 = vmatpush1.msra.mxu0 0.0
    %741 = vmatprep.subr.mxu0 0.0
    %742 = vmatpush1.msra.mxu0 0.0
    %743 = vmatprep.subr.mxu0 0.0
    %744 = vmatpush1.msra.mxu0 0.0
    %745 = vmatprep.subr.mxu0 0.0
    %746 = vmatpush1.msra.mxu0 0.0
    %747 = vmatprep.subr.mxu0 0.0
    %748 = vmatpush1.msra.mxu0 0.0
    %749 = vmatprep.subr.mxu0 0.0
    %750 = vmatpush1.msra.mxu0 0.0
    %751 = vmatprep.subr.mxu0 0.0
    %752 = vmatpush1.msra.mxu0 0.0
    %753 = vmatprep.subr.mxu0 0.0
    %754 = vmatpush1.msra.mxu0 0.0
    %755 = vmatprep.mubr.f32.mxu0 0.0
    %756 = vmatmul.mubr.f32.gmra.mrb[0].mxu0 %v618
    %v757 = vpop.f32.mrb[0].mxu0
    %v758 = vadd.f32 %v564, %v757
    %v759 = vpop.f32.mrb[0].mxu0
    %v760 = vadd.f32 %v568, %v759
    %761 = vdwg.mxu0
    %762 = vmatprep.subr.mxu0 %v526
    %763 = vmatpush1.msra.mxu0 %v525
    %764 = vmatprep.subr.mxu0 0.0
    %765 = vmatpush1.msra.mxu0 0.0
    %766 = vmatprep.subr.mxu0 0.0
    %767 = vmatpush1.msra.mxu0 0.0
    %768 = vmatprep.subr.mxu0 0.0
    %769 = vmatpush1.msra.mxu0 0.0
    %770 = vmatprep.subr.mxu0 0.0
    %771 = vmatpush1.msra.mxu0 0.0
    %772 = vmatprep.subr.mxu0 0.0
    %773 = vmatpush1.msra.mxu0 0.0
    %774 = vmatprep.subr.mxu0 0.0
    %775 = vmatpush1.msra.mxu0 0.0
    %776 = vmatprep.subr.mxu0 0.0
    %777 = vmatpush1.msra.mxu0 0.0
    %778 = vmatprep.subr.mxu0 0.0
    %779 = vmatpush1.msra.mxu0 0.0
    %780 = vmatprep.subr.mxu0 0.0
    %781 = vmatpush1.msra.mxu0 0.0
    %782 = vmatprep.subr.mxu0 0.0
    %783 = vmatpush1.msra.mxu0 0.0
    %784 = vmatprep.subr.mxu0 0.0
    %785 = vmatpush1.msra.mxu0 0.0
    %786 = vmatprep.subr.mxu0 0.0
    %787 = vmatpush1.msra.mxu0 0.0
    %788 = vmatprep.subr.mxu0 0.0
    %789 = vmatpush1.msra.mxu0 0.0
    %790 = vmatprep.subr.mxu0 0.0
    %791 = vmatpush1.msra.mxu0 0.0
    %792 = vmatprep.subr.mxu0 0.0
    %793 = vmatpush1.msra.mxu0 0.0
    %794 = vmatprep.subr.mxu0 0.0
    %795 = vmatpush1.msra.mxu0 0.0
    %796 = vmatprep.subr.mxu0 0.0
    %797 = vmatpush1.msra.mxu0 0.0
    %798 = vmatprep.subr.mxu0 0.0
    %799 = vmatpush1.msra.mxu0 0.0
    %800 = vmatprep.subr.mxu0 0.0
    %801 = vmatpush1.msra.mxu0 0.0
    %802 = vmatprep.subr.mxu0 0.0
    %803 = vmatpush1.msra.mxu0 0.0
    %804 = vmatprep.subr.mxu0 0.0
    %805 = vmatpush1.msra.mxu0 0.0
    %806 = vmatprep.subr.mxu0 0.0
    %807 = vmatpush1.msra.mxu0 0.0
    %808 = vmatprep.subr.mxu0 0.0
    %809 = vmatpush1.msra.mxu0 0.0
    %810 = vmatprep.subr.mxu0 0.0
    %811 = vmatpush1.msra.mxu0 0.0
    %812 = vmatprep.subr.mxu0 0.0
    %813 = vmatpush1.msra.mxu0 0.0
    %814 = vmatprep.subr.mxu0 0.0
    %815 = vmatpush1.msra.mxu0 0.0
    %816 = vmatprep.subr.mxu0 0.0
    %817 = vmatpush1.msra.mxu0 0.0
    %818 = vmatprep.subr.mxu0 0.0
    %819 = vmatpush1.msra.mxu0 0.0
    %820 = vmatprep.subr.mxu0 0.0
    %821 = vmatpush1.msra.mxu0 0.0
    %822 = vmatprep.subr.mxu0 0.0
    %823 = vmatpush1.msra.mxu0 0.0
    %824 = vmatprep.subr.mxu0 0.0
    %825 = vmatpush1.msra.mxu0 0.0
    %826 = vmatprep.mubr.f32.mxu0 0.0
    %827 = vmatmul.mubr.f32.gmra.mrb[0].mxu0 %v618
    %v828 = vpop.f32.mrb[0].mxu0
    %v829 = vadd.f32 %v572, %v828
    %v830 = vpop.f32.mrb[0].mxu0
    %v831 = vadd.f32 %v576, %v830
    %832 = vdwg.mxu0
    %833 = vmatprep.subr.mxu0 %v528
    %834 = vmatpush1.msra.mxu0 %v527
    %835 = vmatprep.subr.mxu0 0.0
    %836 = vmatpush1.msra.mxu0 0.0
    %837 = vmatprep.subr.mxu0 0.0
    %838 = vmatpush1.msra.mxu0 0.0
    %839 = vmatprep.subr.mxu0 0.0
    %840 = vmatpush1.msra.mxu0 0.0
    %841 = vmatprep.subr.mxu0 0.0
    %842 = vmatpush1.msra.mxu0 0.0
    %843 = vmatprep.subr.mxu0 0.0
    %844 = vmatpush1.msra.mxu0 0.0
    %845 = vmatprep.subr.mxu0 0.0
    %846 = vmatpush1.msra.mxu0 0.0
    %847 = vmatprep.subr.mxu0 0.0
    %848 = vmatpush1.msra.mxu0 0.0
    %849 = vmatprep.subr.mxu0 0.0
    %850 = vmatpush1.msra.mxu0 0.0
    %851 = vmatprep.subr.mxu0 0.0
    %852 = vmatpush1.msra.mxu0 0.0
    %853 = vmatprep.subr.mxu0 0.0
    %854 = vmatpush1.msra.mxu0 0.0
    %855 = vmatprep.subr.mxu0 0.0
    %856 = vmatpush1.msra.mxu0 0.0
    %857 = vmatprep.subr.mxu0 0.0
    %858 = vmatpush1.msra.mxu0 0.0
    %859 = vmatprep.subr.mxu0 0.0
    %860 = vmatpush1.msra.mxu0 0.0
    %861 = vmatprep.subr.mxu0 0.0
    %862 = vmatpush1.msra.mxu0 0.0
    %863 = vmatprep.subr.mxu0 0.0
    %864 = vmatpush1.msra.mxu0 0.0
    %865 = vmatprep.subr.mxu0 0.0
    %866 = vmatpush1.msra.mxu0 0.0
    %867 = vmatprep.subr.mxu0 0.0
    %868 = vmatpush1.msra.mxu0 0.0
    %869 = vmatprep.subr.mxu0 0.0
    %870 = vmatpush1.msra.mxu0 0.0
    %871 = vmatprep.subr.mxu0 0.0
    %872 = vmatpush1.msra.mxu0 0.0
    %873 = vmatprep.subr.mxu0 0.0
    %874 = vmatpush1.msra.mxu0 0.0
    %875 = vmatprep.subr.mxu0 0.0
    %876 = vmatpush1.msra.mxu0 0.0
    %877 = vmatprep.subr.mxu0 0.0
    %878 = vmatpush1.msra.mxu0 0.0
    %879 = vmatprep.subr.mxu0 0.0
    %880 = vmatpush1.msra.mxu0 0.0
    %881 = vmatprep.subr.mxu0 0.0
    %882 = vmatpush1.msra.mxu0 0.0
    %883 = vmatprep.subr.mxu0 0.0
    %884 = vmatpush1.msra.mxu0 0.0
    %885 = vmatprep.subr.mxu0 0.0
    %886 = vmatpush1.msra.mxu0 0.0
    %887 = vmatprep.subr.mxu0 0.0
    %888 = vmatpush1.msra.mxu0 0.0
    %889 = vmatprep.subr.mxu0 0.0
    %890 = vmatpush1.msra.mxu0 0.0
    %891 = vmatprep.subr.mxu0 0.0
    %892 = vmatpush1.msra.mxu0 0.0
    %893 = vmatprep.subr.mxu0 0.0
    %894 = vmatpush1.msra.mxu0 0.0
    %895 = vmatprep.subr.mxu0 0.0
    %896 = vmatpush1.msra.mxu0 0.0
    %897 = vmatprep.mubr.f32.mxu0 0.0
    %898 = vmatmul.mubr.f32.gmra.mrb[0].mxu0 %v618
    %v899 = vpop.f32.mrb[0].mxu0
    %v900 = vadd.f32 %v580, %v899
    %v901 = vpop.f32.mrb[0].mxu0
    %v902 = vadd.f32 %v584, %v901
    %903 = vdwg.mxu0
    %904 = vmatprep.subr.mxu0 %v530
    %905 = vmatpush1.msra.mxu0 %v529
    %906 = vmatprep.subr.mxu0 0.0
    %907 = vmatpush1.msra.mxu0 0.0
    %908 = vmatprep.subr.mxu0 0.0
    %909 = vmatpush1.msra.mxu0 0.0
    %910 = vmatprep.subr.mxu0 0.0
    %911 = vmatpush1.msra.mxu0 0.0
    %912 = vmatprep.subr.mxu0 0.0
    %913 = vmatpush1.msra.mxu0 0.0
    %914 = vmatprep.subr.mxu0 0.0
    %915 = vmatpush1.msra.mxu0 0.0
    %916 = vmatprep.subr.mxu0 0.0
    %917 = vmatpush1.msra.mxu0 0.0
    %918 = vmatprep.subr.mxu0 0.0
    %919 = vmatpush1.msra.mxu0 0.0
    %920 = vmatprep.subr.mxu0 0.0
    %921 = vmatpush1.msra.mxu0 0.0
    %922 = vmatprep.subr.mxu0 0.0
    %923 = vmatpush1.msra.mxu0 0.0
    %924 = vmatprep.subr.mxu0 0.0
    %925 = vmatpush1.msra.mxu0 0.0
    %926 = vmatprep.subr.mxu0 0.0
    %927 = vmatpush1.msra.mxu0 0.0
    %928 = vmatprep.subr.mxu0 0.0
    %929 = vmatpush1.msra.mxu0 0.0
    %930 = vmatprep.subr.mxu0 0.0
    %931 = vmatpush1.msra.mxu0 0.0
    %932 = vmatprep.subr.mxu0 0.0
    %933 = vmatpush1.msra.mxu0 0.0
    %934 = vmatprep.subr.mxu0 0.0
    %935 = vmatpush1.msra.mxu0 0.0
    %936 = vmatprep.subr.mxu0 0.0
    %937 = vmatpush1.msra.mxu0 0.0
    %938 = vmatprep.subr.mxu0 0.0
    %939 = vmatpush1.msra.mxu0 0.0
    %940 = vmatprep.subr.mxu0 0.0
    %941 = vmatpush1.msra.mxu0 0.0
    %942 = vmatprep.subr.mxu0 0.0
    %943 = vmatpush1.msra.mxu0 0.0
    %944 = vmatprep.subr.mxu0 0.0
    %945 = vmatpush1.msra.mxu0 0.0
    %946 = vmatprep.subr.mxu0 0.0
    %947 = vmatpush1.msra.mxu0 0.0
    %948 = vmatprep.subr.mxu0 0.0
    %949 = vmatpush1.msra.mxu0 0.0
    %950 = vmatprep.subr.mxu0 0.0
    %951 = vmatpush1.msra.mxu0 0.0
    %952 = vmatprep.subr.mxu0 0.0
    %953 = vmatpush1.msra.mxu0 0.0
    %954 = vmatprep.subr.mxu0 0.0
    %955 = vmatpush1.msra.mxu0 0.0
    %956 = vmatprep.subr.mxu0 0.0
    %957 = vmatpush1.msra.mxu0 0.0
    %958 = vmatprep.subr.mxu0 0.0
    %959 = vmatpush1.msra.mxu0 0.0
    %960 = vmatprep.subr.mxu0 0.0
    %961 = vmatpush1.msra.mxu0 0.0
    %962 = vmatprep.subr.mxu0 0.0
    %963 = vmatpush1.msra.mxu0 0.0
    %964 = vmatprep.subr.mxu0 0.0
    %965 = vmatpush1.msra.mxu0 0.0
    %966 = vmatprep.subr.mxu0 0.0
    %967 = vmatpush1.msra.mxu0 0.0
    %968 = vmatprep.mubr.f32.mxu0 0.0
    %969 = vmatmul.mubr.f32.gmra.mrb[0].mxu0 %v618
    %v970 = vpop.f32.mrb[0].mxu0
    %v971 = vadd.f32 %v588, %v970
    %v972 = vpop.f32.mrb[0].mxu0
    %v973 = vadd.f32 %v592, %v972
    %974 = vdwg.mxu0
    %975 = vmatprep.subr.mxu0 %v532
    %976 = vmatpush1.msra.mxu0 %v531
    %977 = vmatprep.subr.mxu0 0.0
    %978 = vmatpush1.msra.mxu0 0.0
    %979 = vmatprep.subr.mxu0 0.0
    %980 = vmatpush1.msra.mxu0 0.0
    %981 = vmatprep.subr.mxu0 0.0
    %982 = vmatpush1.msra.mxu0 0.0
    %983 = vmatprep.subr.mxu0 0.0
    %984 = vmatpush1.msra.mxu0 0.0
    %985 = vmatprep.subr.mxu0 0.0
    %986 = vmatpush1.msra.mxu0 0.0
    %987 = vmatprep.subr.mxu0 0.0
    %988 = vmatpush1.msra.mxu0 0.0
    %989 = vmatprep.subr.mxu0 0.0
    %990 = vmatpush1.msra.mxu0 0.0
    %991 = vmatprep.subr.mxu0 0.0
    %992 = vmatpush1.msra.mxu0 0.0
    %993 = vmatprep.subr.mxu0 0.0
    %994 = vmatpush1.msra.mxu0 0.0
    %995 = vmatprep.subr.mxu0 0.0
    %996 = vmatpush1.msra.mxu0 0.0
    %997 = vmatprep.subr.mxu0 0.0
    %998 = vmatpush1.msra.mxu0 0.0
    %999 = vmatprep.subr.mxu0 0.0
    %1000 = vmatpush1.msra.mxu0 0.0
    %1001 = vmatprep.subr.mxu0 0.0
    %1002 = vmatpush1.msra.mxu0 0.0
    %1003 = vmatprep.subr.mxu0 0.0
    %1004 = vmatpush1.msra.mxu0 0.0
    %1005 = vmatprep.subr.mxu0 0.0
    %1006 = vmatpush1.msra.mxu0 0.0
    %1007 = vmatprep.subr.mxu0 0.0
    %1008 = vmatpush1.msra.mxu0 0.0
    %1009 = vmatprep.subr.mxu0 0.0
    %1010 = vmatpush1.msra.mxu0 0.0
    %1011 = vmatprep.subr.mxu0 0.0
    %1012 = vmatpush1.msra.mxu0 0.0
    %1013 = vmatprep.subr.mxu0 0.0
    %1014 = vmatpush1.msra.mxu0 0.0
    %1015 = vmatprep.subr.mxu0 0.0
    %1016 = vmatpush1.msra.mxu0 0.0
    %1017 = vmatprep.subr.mxu0 0.0
    %1018 = vmatpush1.msra.mxu0 0.0
    %1019 = vmatprep.subr.mxu0 0.0
    %1020 = vmatpush1.msra.mxu0 0.0
    %1021 = vmatprep.subr.mxu0 0.0
    %1022 = vmatpush1.msra.mxu0 0.0
    %1023 = vmatprep.subr.mxu0 0.0
    %1024 = vmatpush1.msra.mxu0 0.0
    %1025 = vmatprep.subr.mxu0 0.0
    %1026 = vmatpush1.msra.mxu0 0.0
    %1027 = vmatprep.subr.mxu0 0.0
    %1028 = vmatpush1.msra.mxu0 0.0
    %1029 = vmatprep.subr.mxu0 0.0
    %1030 = vmatpush1.msra.mxu0 0.0
    %1031 = vmatprep.subr.mxu0 0.0
    %1032 = vmatpush1.msra.mxu0 0.0
    %1033 = vmatprep.subr.mxu0 0.0
    %1034 = vmatpush1.msra.mxu0 0.0
    %1035 = vmatprep.subr.mxu0 0.0
    %1036 = vmatpush1.msra.mxu0 0.0
    %1037 = vmatprep.subr.mxu0 0.0
    %1038 = vmatpush1.msra.mxu0 0.0
    %1039 = vmatprep.mubr.f32.mxu0 0.0
    %1040 = vmatmul.mubr.f32.gmra.mrb[0].mxu0 %v618
    %v1041 = vpop.f32.mrb[0].mxu0
    %v1042 = vadd.f32 %v596, %v1041
    %v1043 = vpop.f32.mrb[0].mxu0
    %v1044 = vadd.f32 %v600, %v1043
    %1045 = vdwg.mxu0
    %1046 = vmatprep.subr.mxu0 %v534
    %1047 = vmatpush1.msra.mxu0 %v533
    %1048 = vmatprep.subr.mxu0 0.0
    %1049 = vmatpush1.msra.mxu0 0.0
    %1050 = vmatprep.subr.mxu0 0.0
    %1051 = vmatpush1.msra.mxu0 0.0
    %1052 = vmatprep.subr.mxu0 0.0
    %1053 = vmatpush1.msra.mxu0 0.0
    %1054 = vmatprep.subr.mxu0 0.0
    %1055 = vmatpush1.msra.mxu0 0.0
    %1056 = vmatprep.subr.mxu0 0.0
    %1057 = vmatpush1.msra.mxu0 0.0
    %1058 = vmatprep.subr.mxu0 0.0
    %1059 = vmatpush1.msra.mxu0 0.0
    %1060 = vmatprep.subr.mxu0 0.0
    %1061 = vmatpush1.msra.mxu0 0.0
    %1062 = vmatprep.subr.mxu0 0.0
    %1063 = vmatpush1.msra.mxu0 0.0
    %1064 = vmatprep.subr.mxu0 0.0
    %1065 = vmatpush1.msra.mxu0 0.0
    %1066 = vmatprep.subr.mxu0 0.0
    %1067 = vmatpush1.msra.mxu0 0.0
    %1068 = vmatprep.subr.mxu0 0.0
    %1069 = vmatpush1.msra.mxu0 0.0
    %1070 = vmatprep.subr.mxu0 0.0
    %1071 = vmatpush1.msra.mxu0 0.0
    %1072 = vmatprep.subr.mxu0 0.0
    %1073 = vmatpush1.msra.mxu0 0.0
    %1074 = vmatprep.subr.mxu0 0.0
    %1075 = vmatpush1.msra.mxu0 0.0
    %1076 = vmatprep.subr.mxu0 0.0
    %1077 = vmatpush1.msra.mxu0 0.0
    %1078 = vmatprep.subr.mxu0 0.0
    %1079 = vmatpush1.msra.mxu0 0.0
    %1080 = vmatprep.subr.mxu0 0.0
    %1081 = vmatpush1.msra.mxu0 0.0
    %1082 = vmatprep.subr.mxu0 0.0
    %1083 = vmatpush1.msra.mxu0 0.0
    %1084 = vmatprep.subr.mxu0 0.0
    %1085 = vmatpush1.msra.mxu0 0.0
    %1086 = vmatprep.subr.mxu0 0.0
    %1087 = vmatpush1.msra.mxu0 0.0
    %1088 = vmatprep.subr.mxu0 0.0
    %1089 = vmatpush1.msra.mxu0 0.0
    %1090 = vmatprep.subr.mxu0 0.0
    %1091 = vmatpush1.msra.mxu0 0.0
    %1092 = vmatprep.subr.mxu0 0.0
    %1093 = vmatpush1.msra.mxu0 0.0
    %1094 = vmatprep.subr.mxu0 0.0
    %1095 = vmatpush1.msra.mxu0 0.0
    %1096 = vmatprep.subr.mxu0 0.0
    %1097 = vmatpush1.msra.mxu0 0.0
    %1098 = vmatprep.subr.mxu0 0.0
    %1099 = vmatpush1.msra.mxu0 0.0
    %1100 = vmatprep.subr.mxu0 0.0
    %1101 = vmatpush1.msra.mxu0 0.0
    %1102 = vmatprep.subr.mxu0 0.0
    %1103 = vmatpush1.msra.mxu0 0.0
    %1104 = vmatprep.subr.mxu0 0.0
    %1105 = vmatpush1.msra.mxu0 0.0
    %1106 = vmatprep.subr.mxu0 0.0
    %1107 = vmatpush1.msra.mxu0 0.0
    %1108 = vmatprep.subr.mxu0 0.0
    %1109 = vmatpush1.msra.mxu0 0.0
    %1110 = vmatprep.mubr.f32.mxu0 0.0
    %1111 = vmatmul.mubr.f32.gmra.mrb[0].mxu0 %v618
    %v1112 = vpop.f32.mrb[0].mxu0
    %v1113 = vadd.f32 %v604, %v1112
    %v1114 = vpop.f32.mrb[0].mxu0
    %v1115 = vadd.f32 %v608, %v1114
    %1116 = vdwg.mxu0
    %1117 = vmatprep.subr.mxu0 %v536
    %1118 = vmatpush1.msra.mxu0 %v535
    %1119 = vmatprep.subr.mxu0 0.0
    %1120 = vmatpush1.msra.mxu0 0.0
    %1121 = vmatprep.subr.mxu0 0.0
    %1122 = vmatpush1.msra.mxu0 0.0
    %1123 = vmatprep.subr.mxu0 0.0
    %1124 = vmatpush1.msra.mxu0 0.0
    %1125 = vmatprep.subr.mxu0 0.0
    %1126 = vmatpush1.msra.mxu0 0.0
    %1127 = vmatprep.subr.mxu0 0.0
    %1128 = vmatpush1.msra.mxu0 0.0
    %1129 = vmatprep.subr.mxu0 0.0
    %1130 = vmatpush1.msra.mxu0 0.0
    %1131 = vmatprep.subr.mxu0 0.0
    %1132 = vmatpush1.msra.mxu0 0.0
    %1133 = vmatprep.subr.mxu0 0.0
    %1134 = vmatpush1.msra.mxu0 0.0
    %1135 = vmatprep.subr.mxu0 0.0
    %1136 = vmatpush1.msra.mxu0 0.0
    %1137 = vmatprep.subr.mxu0 0.0
    %1138 = vmatpush1.msra.mxu0 0.0
    %1139 = vmatprep.subr.mxu0 0.0
    %1140 = vmatpush1.msra.mxu0 0.0
    %1141 = vmatprep.subr.mxu0 0.0
    %1142 = vmatpush1.msra.mxu0 0.0
    %1143 = vmatprep.subr.mxu0 0.0
    %1144 = vmatpush1.msra.mxu0 0.0
    %1145 = vmatprep.subr.mxu0 0.0
    %1146 = vmatpush1.msra.mxu0 0.0
    %1147 = vmatprep.subr.mxu0 0.0
    %1148 = vmatpush1.msra.mxu0 0.0
    %1149 = vmatprep.subr.mxu0 0.0
    %1150 = vmatpush1.msra.mxu0 0.0
    %1151 = vmatprep.subr.mxu0 0.0
    %1152 = vmatpush1.msra.mxu0 0.0
    %1153 = vmatprep.subr.mxu0 0.0
    %1154 = vmatpush1.msra.mxu0 0.0
    %1155 = vmatprep.subr.mxu0 0.0
    %1156 = vmatpush1.msra.mxu0 0.0
    %1157 = vmatprep.subr.mxu0 0.0
    %1158 = vmatpush1.msra.mxu0 0.0
    %1159 = vmatprep.subr.mxu0 0.0
    %1160 = vmatpush1.msra.mxu0 0.0
    %1161 = vmatprep.subr.mxu0 0.0
    %1162 = vmatpush1.msra.mxu0 0.0
    %1163 = vmatprep.subr.mxu0 0.0
    %1164 = vmatpush1.msra.mxu0 0.0
    %1165 = vmatprep.subr.mxu0 0.0
    %1166 = vmatpush1.msra.mxu0 0.0
    %1167 = vmatprep.subr.mxu0 0.0
    %1168 = vmatpush1.msra.mxu0 0.0
    %1169 = vmatprep.subr.mxu0 0.0
    %1170 = vmatpush1.msra.mxu0 0.0
    %1171 = vmatprep.subr.mxu0 0.0
    %1172 = vmatpush1.msra.mxu0 0.0
    %1173 = vmatprep.subr.mxu0 0.0
    %1174 = vmatpush1.msra.mxu0 0.0
    %1175 = vmatprep.subr.mxu0 0.0
    %1176 = vmatpush1.msra.mxu0 0.0
    %1177 = vmatprep.subr.mxu0 0.0
    %1178 = vmatpush1.msra.mxu0 0.0
    %1179 = vmatprep.subr.mxu0 0.0
    %1180 = vmatpush1.msra.mxu0 0.0
    %1181 = vmatprep.mubr.f32.mxu0 0.0
    %1182 = vmatmul.mubr.f32.gmra.mrb[0].mxu0 %v618
    %v1183 = vpop.f32.mrb[0].mxu0
    %v1184 = vadd.f32 %v612, %v1183
    %v1185 = vpop.f32.mrb[0].mxu0
    %v1186 = vadd.f32 %v616, %v1185
    %1187 = vdwg.mxu0
    %v1188 = vmax.f32 %v687, 0.0
    %v1189 = vmax.f32 %v689, 0.0
    %v1190 = vmax.f32 %v758, 0.0
    %v1191 = vmax.f32 %v760, 0.0
    %v1192 = vmax.f32 %v829, 0.0
    %v1193 = vmax.f32 %v831, 0.0
    %v1194 = vmax.f32 %v900, 0.0
    %v1195 = vmax.f32 %v902, 0.0
    %v1196 = vmax.f32 %v971, 0.0
    %v1197 = vmax.f32 %v973, 0.0
    %v1198 = vmax.f32 %v1042, 0.0
    %v1199 = vmax.f32 %v1044, 0.0
    %v1200 = vmax.f32 %v1113, 0.0
    %v1201 = vmax.f32 %v1115, 0.0
    %v1202 = vmax.f32 %v1184, 0.0
    %v1203 = vmax.f32 %v1186, 0.0
    %v1204 = vld [vmem:[%s3] sm:$0xff]
    %v1205 = vld [vmem:[%s3 + $0x8] sm:$0xff]
    %v1206 = vld [vmem:[%s3 + $0x10] sm:$0xff]
    %v1207 = vld [vmem:[%s3 + $0x18] sm:$0xff]
    %v1208 = vld [vmem:[%s3 + $0x20] sm:$0xff]
    %v1209 = vld [vmem:[%s3 + $0x28] sm:$0xff]
    %v1210 = vld [vmem:[%s3 + $0x30] sm:$0xff]
    %v1211 = vld [vmem:[%s3 + $0x38] sm:$0xff]
    %v1212 = vld [vmem:[%s3 + $0x40] sm:$0xff]
    %v1213 = vld [vmem:[%s3 + $0x48] sm:$0xff]
    %v1214 = vld [vmem:[%s3 + $0x50] sm:$0xff]
    %v1215 = vld [vmem:[%s3 + $0x58] sm:$0xff]
    %v1216 = vld [vmem:[%s3 + $0x60] sm:$0xff]
    %v1217 = vld [vmem:[%s3 + $0x68] sm:$0xff]
    %v1218 = vld [vmem:[%s3 + $0x70] sm:$0xff]
    %v1219 = vld [vmem:[%s3 + $0x78] sm:$0xff]
    %v1220 = vld [vmem:[%s3 + $0x80] sm:$0xff]
    %v1221 = vld [vmem:[%s3 + $0x88] sm:$0xff]
    %v1222 = vld [vmem:[%s3 + $0x90] sm:$0xff]
    %v1223 = vld [vmem:[%s3 + $0x98] sm:$0xff]
    %v1224 = vld [vmem:[%s3 + $0xa0] sm:$0xff]
    %v1225 = vld [vmem:[%s3 + $0xa8] sm:$0xff]
    %v1226 = vld [vmem:[%s3 + $0xb0] sm:$0xff]
    %v1227 = vld [vmem:[%s3 + $0xb8] sm:$0xff]
    %v1228 = vld [vmem:[%s3 + $0xc0] sm:$0xff]
    %v1229 = vld [vmem:[%s3 + $0xc8] sm:$0xff]
    %v1230 = vld [vmem:[%s3 + $0xd0] sm:$0xff]
    %v1231 = vld [vmem:[%s3 + $0xd8] sm:$0xff]
    %v1232 = vld [vmem:[%s3 + $0xe0] sm:$0xff]
    %v1233 = vld [vmem:[%s3 + $0xe8] sm:$0xff]
    %v1234 = vld [vmem:[%s3 + $0xf0] sm:$0xff]
    %v1235 = vld [vmem:[%s3 + $0xf8] sm:$0xff]
    %v1236 = vld [vmem:[%s3 + $0x100] sm:$0xff]
    %v1237 = vld [vmem:[%s3 + $0x108] sm:$0xff]
    %v1238 = vld [vmem:[%s3 + $0x110] sm:$0xff]
    %v1239 = vld [vmem:[%s3 + $0x118] sm:$0xff]
    %v1240 = vld [vmem:[%s3 + $0x120] sm:$0xff]
    %v1241 = vld [vmem:[%s3 + $0x128] sm:$0xff]
    %v1242 = vld [vmem:[%s3 + $0x130] sm:$0xff]
    %v1243 = vld [vmem:[%s3 + $0x138] sm:$0xff]
    %v1244 = vld [vmem:[%s3 + $0x140] sm:$0xff]
    %v1245 = vld [vmem:[%s3 + $0x148] sm:$0xff]
    %v1246 = vld [vmem:[%s3 + $0x150] sm:$0xff]
    %v1247 = vld [vmem:[%s3 + $0x158] sm:$0xff]
    %v1248 = vld [vmem:[%s3 + $0x160] sm:$0xff]
    %v1249 = vld [vmem:[%s3 + $0x168] sm:$0xff]
    %v1250 = vld [vmem:[%s3 + $0x170] sm:$0xff]
    %v1251 = vld [vmem:[%s3 + $0x178] sm:$0xff]
    %v1252 = vld [vmem:[%s3 + $0x180] sm:$0xff]
    %v1253 = vld [vmem:[%s3 + $0x188] sm:$0xff]
    %v1254 = vld [vmem:[%s3 + $0x190] sm:$0xff]
    %v1255 = vld [vmem:[%s3 + $0x198] sm:$0xff]
    %v1256 = vld [vmem:[%s3 + $0x1a0] sm:$0xff]
    %v1257 = vld [vmem:[%s3 + $0x1a8] sm:$0xff]
    %v1258 = vld [vmem:[%s3 + $0x1b0] sm:$0xff]
    %v1259 = vld [vmem:[%s3 + $0x1b8] sm:$0xff]
    %v1260 = vld [vmem:[%s3 + $0x1c0] sm:$0xff]
    %v1261 = vld [vmem:[%s3 + $0x1c8] sm:$0xff]
    %v1262 = vld [vmem:[%s3 + $0x1d0] sm:$0xff]
    %v1263 = vld [vmem:[%s3 + $0x1d8] sm:$0xff]
    %v1264 = vld [vmem:[%s3 + $0x1e0] sm:$0xff]
    %v1265 = vld [vmem:[%s3 + $0x1e8] sm:$0xff]
    %v1266 = vld [vmem:[%s3 + $0x1f0] sm:$0xff]
    %v1267 = vld [vmem:[%s3 + $0x1f8] sm:$0xff]
    %v1268 = vld [vmem:[%s3 + $0x200] sm:$0xff]
    %v1269 = vld [vmem:[%s3 + $0x208] sm:$0xff]
    %v1270 = vld [vmem:[%s3 + $0x210] sm:$0xff]
    %v1271 = vld [vmem:[%s3 + $0x218] sm:$0xff]
    %v1272 = vld [vmem:[%s3 + $0x220] sm:$0xff]
    %v1273 = vld [vmem:[%s3 + $0x228] sm:$0xff]
    %v1274 = vld [vmem:[%s3 + $0x230] sm:$0xff]
    %v1275 = vld [vmem:[%s3 + $0x238] sm:$0xff]
    %v1276 = vld [vmem:[%s3 + $0x240] sm:$0xff]
    %v1277 = vld [vmem:[%s3 + $0x248] sm:$0xff]
    %v1278 = vld [vmem:[%s3 + $0x250] sm:$0xff]
    %v1279 = vld [vmem:[%s3 + $0x258] sm:$0xff]
    %v1280 = vld [vmem:[%s3 + $0x260] sm:$0xff]
    %v1281 = vld [vmem:[%s3 + $0x268] sm:$0xff]
    %v1282 = vld [vmem:[%s3 + $0x270] sm:$0xff]
    %v1283 = vld [vmem:[%s3 + $0x278] sm:$0xff]
    %v1284 = vld [vmem:[%s3 + $0x280] sm:$0xff]
    %v1285 = vld [vmem:[%s3 + $0x288] sm:$0xff]
    %v1286 = vld [vmem:[%s3 + $0x290] sm:$0xff]
    %v1287 = vld [vmem:[%s3 + $0x298] sm:$0xff]
    %v1288 = vld [vmem:[%s3 + $0x2a0] sm:$0xff]
    %v1289 = vld [vmem:[%s3 + $0x2a8] sm:$0xff]
    %v1290 = vld [vmem:[%s3 + $0x2b0] sm:$0xff]
    %v1291 = vld [vmem:[%s3 + $0x2b8] sm:$0xff]
    %v1292 = vld [vmem:[%s3 + $0x2c0] sm:$0xff]
    %v1293 = vld [vmem:[%s3 + $0x2c8] sm:$0xff]
    %v1294 = vld [vmem:[%s3 + $0x2d0] sm:$0xff]
    %v1295 = vld [vmem:[%s3 + $0x2d8] sm:$0xff]
    %v1296 = vld [vmem:[%s3 + $0x2e0] sm:$0xff]
    %v1297 = vld [vmem:[%s3 + $0x2e8] sm:$0xff]
    %v1298 = vld [vmem:[%s3 + $0x2f0] sm:$0xff]
    %v1299 = vld [vmem:[%s3 + $0x2f8] sm:$0xff]
    %v1300 = vld [vmem:[%s3 + $0x300] sm:$0xff]
    %v1301 = vld [vmem:[%s3 + $0x308] sm:$0xff]
    %v1302 = vld [vmem:[%s3 + $0x310] sm:$0xff]
    %v1303 = vld [vmem:[%s3 + $0x318] sm:$0xff]
    %v1304 = vld [vmem:[%s3 + $0x320] sm:$0xff]
    %v1305 = vld [vmem:[%s3 + $0x328] sm:$0xff]
    %v1306 = vld [vmem:[%s3 + $0x330] sm:$0xff]
    %v1307 = vld [vmem:[%s3 + $0x338] sm:$0xff]
    %v1308 = vld [vmem:[%s3 + $0x340] sm:$0xff]
    %v1309 = vld [vmem:[%s3 + $0x348] sm:$0xff]
    %v1310 = vld [vmem:[%s3 + $0x350] sm:$0xff]
    %v1311 = vld [vmem:[%s3 + $0x358] sm:$0xff]
    %v1312 = vld [vmem:[%s3 + $0x360] sm:$0xff]
    %v1313 = vld [vmem:[%s3 + $0x368] sm:$0xff]
    %v1314 = vld [vmem:[%s3 + $0x370] sm:$0xff]
    %v1315 = vld [vmem:[%s3 + $0x378] sm:$0xff]
    %v1316 = vld [vmem:[%s3 + $0x380] sm:$0xff]
    %v1317 = vld [vmem:[%s3 + $0x388] sm:$0xff]
    %v1318 = vld [vmem:[%s3 + $0x390] sm:$0xff]
    %v1319 = vld [vmem:[%s3 + $0x398] sm:$0xff]
    %v1320 = vld [vmem:[%s3 + $0x3a0] sm:$0xff]
    %v1321 = vld [vmem:[%s3 + $0x3a8] sm:$0xff]
    %v1322 = vld [vmem:[%s3 + $0x3b0] sm:$0xff]
    %v1323 = vld [vmem:[%s3 + $0x3b8] sm:$0xff]
    %v1324 = vld [vmem:[%s3 + $0x3c0] sm:$0xff]
    %v1325 = vld [vmem:[%s3 + $0x3c8] sm:$0xff]
    %v1326 = vld [vmem:[%s3 + $0x3d0] sm:$0xff]
    %v1327 = vld [vmem:[%s3 + $0x3d8] sm:$0xff]
    %v1328 = vld [vmem:[%s3 + $0x3e0] sm:$0xff]
    %v1329 = vld [vmem:[%s3 + $0x3e8] sm:$0xff]
    %v1330 = vld [vmem:[%s3 + $0x3f0] sm:$0xff]
    %v1331 = vld [vmem:[%s3 + $0x3f8] sm:$0xff]
    %v1332 = vld [vmem:[%s3 + $0x400] sm:$0xff]
    %v1333 = vld [vmem:[%s3 + $0x408] sm:$0xff]
    %v1334 = vld [vmem:[%s3 + $0x410] sm:$0xff]
    %v1335 = vld [vmem:[%s3 + $0x418] sm:$0xff]
    %v1336 = vld [vmem:[%s3 + $0x420] sm:$0xff]
    %v1337 = vld [vmem:[%s3 + $0x428] sm:$0xff]
    %v1338 = vld [vmem:[%s3 + $0x430] sm:$0xff]
    %v1339 = vld [vmem:[%s3 + $0x438] sm:$0xff]
    %v1340 = vld [vmem:[%s3 + $0x440] sm:$0xff]
    %v1341 = vld [vmem:[%s3 + $0x448] sm:$0xff]
    %v1342 = vld [vmem:[%s3 + $0x450] sm:$0xff]
    %v1343 = vld [vmem:[%s3 + $0x458] sm:$0xff]
    %v1344 = vld [vmem:[%s3 + $0x460] sm:$0xff]
    %v1345 = vld [vmem:[%s3 + $0x468] sm:$0xff]
    %v1346 = vld [vmem:[%s3 + $0x470] sm:$0xff]
    %v1347 = vld [vmem:[%s3 + $0x478] sm:$0xff]
    %v1348 = vld [vmem:[%s3 + $0x480] sm:$0xff]
    %v1349 = vld [vmem:[%s3 + $0x488] sm:$0xff]
    %v1350 = vld [vmem:[%s3 + $0x490] sm:$0xff]
    %v1351 = vld [vmem:[%s3 + $0x498] sm:$0xff]
    %v1352 = vld [vmem:[%s3 + $0x4a0] sm:$0xff]
    %v1353 = vld [vmem:[%s3 + $0x4a8] sm:$0xff]
    %v1354 = vld [vmem:[%s3 + $0x4b0] sm:$0xff]
    %v1355 = vld [vmem:[%s3 + $0x4b8] sm:$0xff]
    %v1356 = vld [vmem:[%s3 + $0x4c0] sm:$0xff]
    %v1357 = vld [vmem:[%s3 + $0x4c8] sm:$0xff]
    %v1358 = vld [vmem:[%s3 + $0x4d0] sm:$0xff]
    %v1359 = vld [vmem:[%s3 + $0x4d8] sm:$0xff]
    %v1360 = vld [vmem:[%s3 + $0x4e0] sm:$0xff]
    %v1361 = vld [vmem:[%s3 + $0x4e8] sm:$0xff]
    %v1362 = vld [vmem:[%s3 + $0x4f0] sm:$0xff]
    %v1363 = vld [vmem:[%s3 + $0x4f8] sm:$0xff]
    %v1364 = vld [vmem:[%s3 + $0x500] sm:$0xff]
    %v1365 = vld [vmem:[%s3 + $0x508] sm:$0xff]
    %v1366 = vld [vmem:[%s3 + $0x510] sm:$0xff]
    %v1367 = vld [vmem:[%s3 + $0x518] sm:$0xff]
    %v1368 = vld [vmem:[%s3 + $0x520] sm:$0xff]
    %v1369 = vld [vmem:[%s3 + $0x528] sm:$0xff]
    %v1370 = vld [vmem:[%s3 + $0x530] sm:$0xff]
    %v1371 = vld [vmem:[%s3 + $0x538] sm:$0xff]
    %v1372 = vld [vmem:[%s3 + $0x540] sm:$0xff]
    %v1373 = vld [vmem:[%s3 + $0x548] sm:$0xff]
    %v1374 = vld [vmem:[%s3 + $0x550] sm:$0xff]
    %v1375 = vld [vmem:[%s3 + $0x558] sm:$0xff]
    %v1376 = vld [vmem:[%s3 + $0x560] sm:$0xff]
    %v1377 = vld [vmem:[%s3 + $0x568] sm:$0xff]
    %v1378 = vld [vmem:[%s3 + $0x570] sm:$0xff]
    %v1379 = vld [vmem:[%s3 + $0x578] sm:$0xff]
    %v1380 = vld [vmem:[%s3 + $0x580] sm:$0xff]
    %v1381 = vld [vmem:[%s3 + $0x588] sm:$0xff]
    %v1382 = vld [vmem:[%s3 + $0x590] sm:$0xff]
    %v1383 = vld [vmem:[%s3 + $0x598] sm:$0xff]
    %v1384 = vld [vmem:[%s3 + $0x5a0] sm:$0xff]
    %v1385 = vld [vmem:[%s3 + $0x5a8] sm:$0xff]
    %v1386 = vld [vmem:[%s3 + $0x5b0] sm:$0xff]
    %v1387 = vld [vmem:[%s3 + $0x5b8] sm:$0xff]
    %v1388 = vld [vmem:[%s3 + $0x5c0] sm:$0xff]
    %v1389 = vld [vmem:[%s3 + $0x5c8] sm:$0xff]
    %v1390 = vld [vmem:[%s3 + $0x5d0] sm:$0xff]
    %v1391 = vld [vmem:[%s3 + $0x5d8] sm:$0xff]
    %v1392 = vld [vmem:[%s3 + $0x5e0] sm:$0xff]
    %v1393 = vld [vmem:[%s3 + $0x5e8] sm:$0xff]
    %v1394 = vld [vmem:[%s3 + $0x5f0] sm:$0xff]
    %v1395 = vld [vmem:[%s3 + $0x5f8] sm:$0xff]
    %v1396 = vld [vmem:[%s3 + $0x600] sm:$0xff]
    %v1397 = vld [vmem:[%s3 + $0x608] sm:$0xff]
    %v1398 = vld [vmem:[%s3 + $0x610] sm:$0xff]
    %v1399 = vld [vmem:[%s3 + $0x618] sm:$0xff]
    %v1400 = vld [vmem:[%s3 + $0x620] sm:$0xff]
    %v1401 = vld [vmem:[%s3 + $0x628] sm:$0xff]
    %v1402 = vld [vmem:[%s3 + $0x630] sm:$0xff]
    %v1403 = vld [vmem:[%s3 + $0x638] sm:$0xff]
    %v1404 = vld [vmem:[%s3 + $0x640] sm:$0xff]
    %v1405 = vld [vmem:[%s3 + $0x648] sm:$0xff]
    %v1406 = vld [vmem:[%s3 + $0x650] sm:$0xff]
    %v1407 = vld [vmem:[%s3 + $0x658] sm:$0xff]
    %v1408 = vld [vmem:[%s3 + $0x660] sm:$0xff]
    %v1409 = vld [vmem:[%s3 + $0x668] sm:$0xff]
    %v1410 = vld [vmem:[%s3 + $0x670] sm:$0xff]
    %v1411 = vld [vmem:[%s3 + $0x678] sm:$0xff]
    %v1412 = vld [vmem:[%s3 + $0x680] sm:$0xff]
    %v1413 = vld [vmem:[%s3 + $0x688] sm:$0xff]
    %v1414 = vld [vmem:[%s3 + $0x690] sm:$0xff]
    %v1415 = vld [vmem:[%s3 + $0x698] sm:$0xff]
    %v1416 = vld [vmem:[%s3 + $0x6a0] sm:$0xff]
    %v1417 = vld [vmem:[%s3 + $0x6a8] sm:$0xff]
    %v1418 = vld [vmem:[%s3 + $0x6b0] sm:$0xff]
    %v1419 = vld [vmem:[%s3 + $0x6b8] sm:$0xff]
    %v1420 = vld [vmem:[%s3 + $0x6c0] sm:$0xff]
    %v1421 = vld [vmem:[%s3 + $0x6c8] sm:$0xff]
    %v1422 = vld [vmem:[%s3 + $0x6d0] sm:$0xff]
    %v1423 = vld [vmem:[%s3 + $0x6d8] sm:$0xff]
    %v1424 = vld [vmem:[%s3 + $0x6e0] sm:$0xff]
    %v1425 = vld [vmem:[%s3 + $0x6e8] sm:$0xff]
    %v1426 = vld [vmem:[%s3 + $0x6f0] sm:$0xff]
    %v1427 = vld [vmem:[%s3 + $0x6f8] sm:$0xff]
    %v1428 = vld [vmem:[%s3 + $0x700] sm:$0xff]
    %v1429 = vld [vmem:[%s3 + $0x708] sm:$0xff]
    %v1430 = vld [vmem:[%s3 + $0x710] sm:$0xff]
    %v1431 = vld [vmem:[%s3 + $0x718] sm:$0xff]
    %v1432 = vld [vmem:[%s3 + $0x720] sm:$0xff]
    %v1433 = vld [vmem:[%s3 + $0x728] sm:$0xff]
    %v1434 = vld [vmem:[%s3 + $0x730] sm:$0xff]
    %v1435 = vld [vmem:[%s3 + $0x738] sm:$0xff]
    %v1436 = vld [vmem:[%s3 + $0x740] sm:$0xff]
    %v1437 = vld [vmem:[%s3 + $0x748] sm:$0xff]
    %v1438 = vld [vmem:[%s3 + $0x750] sm:$0xff]
    %v1439 = vld [vmem:[%s3 + $0x758] sm:$0xff]
    %v1440 = vld [vmem:[%s3 + $0x760] sm:$0xff]
    %v1441 = vld [vmem:[%s3 + $0x768] sm:$0xff]
    %v1442 = vld [vmem:[%s3 + $0x770] sm:$0xff]
    %v1443 = vld [vmem:[%s3 + $0x778] sm:$0xff]
    %v1444 = vld [vmem:[%s3 + $0x780] sm:$0xff]
    %v1445 = vld [vmem:[%s3 + $0x788] sm:$0xff]
    %v1446 = vld [vmem:[%s3 + $0x790] sm:$0xff]
    %v1447 = vld [vmem:[%s3 + $0x798] sm:$0xff]
    %v1448 = vld [vmem:[%s3 + $0x7a0] sm:$0xff]
    %v1449 = vld [vmem:[%s3 + $0x7a8] sm:$0xff]
    %v1450 = vld [vmem:[%s3 + $0x7b0] sm:$0xff]
    %v1451 = vld [vmem:[%s3 + $0x7b8] sm:$0xff]
    %v1452 = vld [vmem:[%s3 + $0x7c0] sm:$0xff]
    %v1453 = vld [vmem:[%s3 + $0x7c8] sm:$0xff]
    %v1454 = vld [vmem:[%s3 + $0x7d0] sm:$0xff]
    %v1455 = vld [vmem:[%s3 + $0x7d8] sm:$0xff]
    %v1456 = vld [vmem:[%s3 + $0x7e0] sm:$0xff]
    %v1457 = vld [vmem:[%s3 + $0x7e8] sm:$0xff]
    %v1458 = vld [vmem:[%s3 + $0x7f0] sm:$0xff]
    %v1459 = vld [vmem:[%s3 + $0x7f8] sm:$0xff]
    %v1460 = vlaneseq
    %v1461 = vshrl.u32 %v1460, 7
    %v1462 = vsub.s32 4, %v1461
    %v1463 = vrot.slane %v25, %v1462
    %1464 = vmatprep.subr.mxu0 0.0
    %1465 = vmatpush1.msra.mxu0 %v1204
    %1466 = vmatprep.subr.mxu0 0.0
    %1467 = vmatpush1.msra.mxu0 %v1205
    %1468 = vmatprep.subr.mxu0 0.0
    %1469 = vmatpush1.msra.mxu0 %v1206
    %1470 = vmatprep.subr.mxu0 0.0
    %1471 = vmatpush1.msra.mxu0 %v1207
    %1472 = vmatprep.subr.mxu0 0.0
    %1473 = vmatpush1.msra.mxu0 %v1208
    %1474 = vmatprep.subr.mxu0 0.0
    %1475 = vmatpush1.msra.mxu0 %v1209
    %1476 = vmatprep.subr.mxu0 0.0
    %1477 = vmatpush1.msra.mxu0 %v1210
    %1478 = vmatprep.subr.mxu0 0.0
    %1479 = vmatpush1.msra.mxu0 %v1211
    %1480 = vmatprep.subr.mxu0 0.0
    %1481 = vmatpush1.msra.mxu0 %v1212
    %1482 = vmatprep.subr.mxu0 0.0
    %1483 = vmatpush1.msra.mxu0 %v1213
    %1484 = vmatprep.subr.mxu0 0.0
    %1485 = vmatpush1.msra.mxu0 %v1214
    %1486 = vmatprep.subr.mxu0 0.0
    %1487 = vmatpush1.msra.mxu0 %v1215
    %1488 = vmatprep.subr.mxu0 0.0
    %1489 = vmatpush1.msra.mxu0 %v1216
    %1490 = vmatprep.subr.mxu0 0.0
    %1491 = vmatpush1.msra.mxu0 %v1217
    %1492 = vmatprep.subr.mxu0 0.0
    %1493 = vmatpush1.msra.mxu0 %v1218
    %1494 = vmatprep.subr.mxu0 0.0
    %1495 = vmatpush1.msra.mxu0 %v1219
    %1496 = vmatprep.subr.mxu0 0.0
    %1497 = vmatpush1.msra.mxu0 %v1220
    %1498 = vmatprep.subr.mxu0 0.0
    %1499 = vmatpush1.msra.mxu0 %v1221
    %1500 = vmatprep.subr.mxu0 0.0
    %1501 = vmatpush1.msra.mxu0 %v1222
    %1502 = vmatprep.subr.mxu0 0.0
    %1503 = vmatpush1.msra.mxu0 %v1223
    %1504 = vmatprep.subr.mxu0 0.0
    %1505 = vmatpush1.msra.mxu0 %v1224
    %1506 = vmatprep.subr.mxu0 0.0
    %1507 = vmatpush1.msra.mxu0 %v1225
    %1508 = vmatprep.subr.mxu0 0.0
    %1509 = vmatpush1.msra.mxu0 %v1226
    %1510 = vmatprep.subr.mxu0 0.0
    %1511 = vmatpush1.msra.mxu0 %v1227
    %1512 = vmatprep.subr.mxu0 0.0
    %1513 = vmatpush1.msra.mxu0 %v1228
    %1514 = vmatprep.subr.mxu0 0.0
    %1515 = vmatpush1.msra.mxu0 %v1229
    %1516 = vmatprep.subr.mxu0 0.0
    %1517 = vmatpush1.msra.mxu0 %v1230
    %1518 = vmatprep.subr.mxu0 0.0
    %1519 = vmatpush1.msra.mxu0 %v1231
    %1520 = vmatprep.subr.mxu0 0.0
    %1521 = vmatpush1.msra.mxu0 %v1232
    %1522 = vmatprep.subr.mxu0 0.0
    %1523 = vmatpush1.msra.mxu0 %v1233
    %1524 = vmatprep.subr.mxu0 0.0
    %1525 = vmatpush1.msra.mxu0 %v1234
    %1526 = vmatprep.subr.mxu0 0.0
    %1527 = vmatpush1.msra.mxu0 %v1235
    %1528 = vmatprep.mubr.f32.mxu0 %v1189
    %1529 = vmatmul.mubr.f32.gmra.mrb[0].mxu0 %v1188
    %v1530 = vpop.f32.mrb[0].mxu0
    %v1531 = vadd.f32 %v1463, %v1530
    %v1532 = vpop.f32.mrb[0].mxu0
    %1533 = vdwg.mxu0
    %1534 = vmatprep.subr.mxu0 0.0
    %1535 = vmatpush1.msra.mxu0 %v1236
    %1536 = vmatprep.subr.mxu0 0.0
    %1537 = vmatpush1.msra.mxu0 %v1237
    %1538 = vmatprep.subr.mxu0 0.0
    %1539 = vmatpush1.msra.mxu0 %v1238
    %1540 = vmatprep.subr.mxu0 0.0
    %1541 = vmatpush1.msra.mxu0 %v1239
    %1542 = vmatprep.subr.mxu0 0.0
    %1543 = vmatpush1.msra.mxu0 %v1240
    %1544 = vmatprep.subr.mxu0 0.0
    %1545 = vmatpush1.msra.mxu0 %v1241
    %1546 = vmatprep.subr.mxu0 0.0
    %1547 = vmatpush1.msra.mxu0 %v1242
    %1548 = vmatprep.subr.mxu0 0.0
    %1549 = vmatpush1.msra.mxu0 %v1243
    %1550 = vmatprep.subr.mxu0 0.0
    %1551 = vmatpush1.msra.mxu0 %v1244
    %1552 = vmatprep.subr.mxu0 0.0
    %1553 = vmatpush1.msra.mxu0 %v1245
    %1554 = vmatprep.subr.mxu0 0.0
    %1555 = vmatpush1.msra.mxu0 %v1246
    %1556 = vmatprep.subr.mxu0 0.0
    %1557 = vmatpush1.msra.mxu0 %v1247
    %1558 = vmatprep.subr.mxu0 0.0
    %1559 = vmatpush1.msra.mxu0 %v1248
    %1560 = vmatprep.subr.mxu0 0.0
    %1561 = vmatpush1.msra.mxu0 %v1249
    %1562 = vmatprep.subr.mxu0 0.0
    %1563 = vmatpush1.msra.mxu0 %v1250
    %1564 = vmatprep.subr.mxu0 0.0
    %1565 = vmatpush1.msra.mxu0 %v1251
    %1566 = vmatprep.subr.mxu0 0.0
    %1567 = vmatpush1.msra.mxu0 %v1252
    %1568 = vmatprep.subr.mxu0 0.0
    %1569 = vmatpush1.msra.mxu0 %v1253
    %1570 = vmatprep.subr.mxu0 0.0
    %1571 = vmatpush1.msra.mxu0 %v1254
    %1572 = vmatprep.subr.mxu0 0.0
    %1573 = vmatpush1.msra.mxu0 %v1255
    %1574 = vmatprep.subr.mxu0 0.0
    %1575 = vmatpush1.msra.mxu0 %v1256
    %1576 = vmatprep.subr.mxu0 0.0
    %1577 = vmatpush1.msra.mxu0 %v1257
    %1578 = vmatprep.subr.mxu0 0.0
    %1579 = vmatpush1.msra.mxu0 %v1258
    %1580 = vmatprep.subr.mxu0 0.0
    %1581 = vmatpush1.msra.mxu0 %v1259
    %1582 = vmatprep.subr.mxu0 0.0
    %1583 = vmatpush1.msra.mxu0 %v1260
    %1584 = vmatprep.subr.mxu0 0.0
    %1585 = vmatpush1.msra.mxu0 %v1261
    %1586 = vmatprep.subr.mxu0 0.0
    %1587 = vmatpush1.msra.mxu0 %v1262
    %1588 = vmatprep.subr.mxu0 0.0
    %1589 = vmatpush1.msra.mxu0 %v1263
    %1590 = vmatprep.subr.mxu0 0.0
    %1591 = vmatpush1.msra.mxu0 %v1264
    %1592 = vmatprep.subr.mxu0 0.0
    %1593 = vmatpush1.msra.mxu0 %v1265
    %1594 = vmatprep.subr.mxu0 0.0
    %1595 = vmatpush1.msra.mxu0 %v1266
    %1596 = vmatprep.subr.mxu0 0.0
    %1597 = vmatpush1.msra.mxu0 %v1267
    %1598 = vmatprep.mubr.f32.mxu0 %v1191
    %1599 = vmatmul.mubr.f32.gmra.mrb[0].mxu0 %v1190
    %v1600 = vpop.f32.mrb[0].mxu0
    %v1601 = vadd.f32 %v1531, %v1600
    %v1602 = vpop.f32.mrb[0].mxu0
    %1603 = vdwg.mxu0
    %1604 = vmatprep.subr.mxu0 0.0
    %1605 = vmatpush1.msra.mxu0 %v1268
    %1606 = vmatprep.subr.mxu0 0.0
    %1607 = vmatpush1.msra.mxu0 %v1269
    %1608 = vmatprep.subr.mxu0 0.0
    %1609 = vmatpush1.msra.mxu0 %v1270
    %1610 = vmatprep.subr.mxu0 0.0
    %1611 = vmatpush1.msra.mxu0 %v1271
    %1612 = vmatprep.subr.mxu0 0.0
    %1613 = vmatpush1.msra.mxu0 %v1272
    %1614 = vmatprep.subr.mxu0 0.0
    %1615 = vmatpush1.msra.mxu0 %v1273
    %1616 = vmatprep.subr.mxu0 0.0
    %1617 = vmatpush1.msra.mxu0 %v1274
    %1618 = vmatprep.subr.mxu0 0.0
    %1619 = vmatpush1.msra.mxu0 %v1275
    %1620 = vmatprep.subr.mxu0 0.0
    %1621 = vmatpush1.msra.mxu0 %v1276
    %1622 = vmatprep.subr.mxu0 0.0
    %1623 = vmatpush1.msra.mxu0 %v1277
    %1624 = vmatprep.subr.mxu0 0.0
    %1625 = vmatpush1.msra.mxu0 %v1278
    %1626 = vmatprep.subr.mxu0 0.0
    %1627 = vmatpush1.msra.mxu0 %v1279
    %1628 = vmatprep.subr.mxu0 0.0
    %1629 = vmatpush1.msra.mxu0 %v1280
    %1630 = vmatprep.subr.mxu0 0.0
    %1631 = vmatpush1.msra.mxu0 %v1281
    %1632 = vmatprep.subr.mxu0 0.0
    %1633 = vmatpush1.msra.mxu0 %v1282
    %1634 = vmatprep.subr.mxu0 0.0
    %1635 = vmatpush1.msra.mxu0 %v1283
    %1636 = vmatprep.subr.mxu0 0.0
    %1637 = vmatpush1.msra.mxu0 %v1284
    %1638 = vmatprep.subr.mxu0 0.0
    %1639 = vmatpush1.msra.mxu0 %v1285
    %1640 = vmatprep.subr.mxu0 0.0
    %1641 = vmatpush1.msra.mxu0 %v1286
    %1642 = vmatprep.subr.mxu0 0.0
    %1643 = vmatpush1.msra.mxu0 %v1287
    %1644 = vmatprep.subr.mxu0 0.0
    %1645 = vmatpush1.msra.mxu0 %v1288
    %1646 = vmatprep.subr.mxu0 0.0
    %1647 = vmatpush1.msra.mxu0 %v1289
    %1648 = vmatprep.subr.mxu0 0.0
    %1649 = vmatpush1.msra.mxu0 %v1290
    %1650 = vmatprep.subr.mxu0 0.0
    %1651 = vmatpush1.msra.mxu0 %v1291
    %1652 = vmatprep.subr.mxu0 0.0
    %1653 = vmatpush1.msra.mxu0 %v1292
    %1654 = vmatprep.subr.mxu0 0.0
    %1655 = vmatpush1.msra.mxu0 %v1293
    %1656 = vmatprep.subr.mxu0 0.0
    %1657 = vmatpush1.msra.mxu0 %v1294
    %1658 = vmatprep.subr.mxu0 0.0
    %1659 = vmatpush1.msra.mxu0 %v1295
    %1660 = vmatprep.subr.mxu0 0.0
    %1661 = vmatpush1.msra.mxu0 %v1296
    %1662 = vmatprep.subr.mxu0 0.0
    %1663 = vmatpush1.msra.mxu0 %v1297
    %1664 = vmatprep.subr.mxu0 0.0
    %1665 = vmatpush1.msra.mxu0 %v1298
    %1666 = vmatprep.subr.mxu0 0.0
    %1667 = vmatpush1.msra.mxu0 %v1299
    %1668 = vmatprep.mubr.f32.mxu0 %v1193
    %1669 = vmatmul.mubr.f32.gmra.mrb[0].mxu0 %v1192
    %v1670 = vpop.f32.mrb[0].mxu0
    %v1671 = vadd.f32 %v1601, %v1670
    %v1672 = vpop.f32.mrb[0].mxu0
    %1673 = vdwg.mxu0
    %1674 = vmatprep.subr.mxu0 0.0
    %1675 = vmatpush1.msra.mxu0 %v1300
    %1676 = vmatprep.subr.mxu0 0.0
    %1677 = vmatpush1.msra.mxu0 %v1301
    %1678 = vmatprep.subr.mxu0 0.0
    %1679 = vmatpush1.msra.mxu0 %v1302
    %1680 = vmatprep.subr.mxu0 0.0
    %1681 = vmatpush1.msra.mxu0 %v1303
    %1682 = vmatprep.subr.mxu0 0.0
    %1683 = vmatpush1.msra.mxu0 %v1304
    %1684 = vmatprep.subr.mxu0 0.0
    %1685 = vmatpush1.msra.mxu0 %v1305
    %1686 = vmatprep.subr.mxu0 0.0
    %1687 = vmatpush1.msra.mxu0 %v1306
    %1688 = vmatprep.subr.mxu0 0.0
    %1689 = vmatpush1.msra.mxu0 %v1307
    %1690 = vmatprep.subr.mxu0 0.0
    %1691 = vmatpush1.msra.mxu0 %v1308
    %1692 = vmatprep.subr.mxu0 0.0
    %1693 = vmatpush1.msra.mxu0 %v1309
    %1694 = vmatprep.subr.mxu0 0.0
    %1695 = vmatpush1.msra.mxu0 %v1310
    %1696 = vmatprep.subr.mxu0 0.0
    %1697 = vmatpush1.msra.mxu0 %v1311
    %1698 = vmatprep.subr.mxu0 0.0
    %1699 = vmatpush1.msra.mxu0 %v1312
    %1700 = vmatprep.subr.mxu0 0.0
    %1701 = vmatpush1.msra.mxu0 %v1313
    %1702 = vmatprep.subr.mxu0 0.0
    %1703 = vmatpush1.msra.mxu0 %v1314
    %1704 = vmatprep.subr.mxu0 0.0
    %1705 = vmatpush1.msra.mxu0 %v1315
    %1706 = vmatprep.subr.mxu0 0.0
    %1707 = vmatpush1.msra.mxu0 %v1316
    %1708 = vmatprep.subr.mxu0 0.0
    %1709 = vmatpush1.msra.mxu0 %v1317
    %1710 = vmatprep.subr.mxu0 0.0
    %1711 = vmatpush1.msra.mxu0 %v1318
    %1712 = vmatprep.subr.mxu0 0.0
    %1713 = vmatpush1.msra.mxu0 %v1319
    %1714 = vmatprep.subr.mxu0 0.0
    %1715 = vmatpush1.msra.mxu0 %v1320
    %1716 = vmatprep.subr.mxu0 0.0
    %1717 = vmatpush1.msra.mxu0 %v1321
    %1718 = vmatprep.subr.mxu0 0.0
    %1719 = vmatpush1.msra.mxu0 %v1322
    %1720 = vmatprep.subr.mxu0 0.0
    %1721 = vmatpush1.msra.mxu0 %v1323
    %1722 = vmatprep.subr.mxu0 0.0
    %1723 = vmatpush1.msra.mxu0 %v1324
    %1724 = vmatprep.subr.mxu0 0.0
    %1725 = vmatpush1.msra.mxu0 %v1325
    %1726 = vmatprep.subr.mxu0 0.0
    %1727 = vmatpush1.msra.mxu0 %v1326
    %1728 = vmatprep.subr.mxu0 0.0
    %1729 = vmatpush1.msra.mxu0 %v1327
    %1730 = vmatprep.subr.mxu0 0.0
    %1731 = vmatpush1.msra.mxu0 %v1328
    %1732 = vmatprep.subr.mxu0 0.0
    %1733 = vmatpush1.msra.mxu0 %v1329
    %1734 = vmatprep.subr.mxu0 0.0
    %1735 = vmatpush1.msra.mxu0 %v1330
    %1736 = vmatprep.subr.mxu0 0.0
    %1737 = vmatpush1.msra.mxu0 %v1331
    %1738 = vmatprep.mubr.f32.mxu0 %v1195
    %1739 = vmatmul.mubr.f32.gmra.mrb[0].mxu0 %v1194
    %v1740 = vpop.f32.mrb[0].mxu0
    %v1741 = vadd.f32 %v1671, %v1740
    %v1742 = vpop.f32.mrb[0].mxu0
    %1743 = vdwg.mxu0
    %1744 = vmatprep.subr.mxu0 0.0
    %1745 = vmatpush1.msra.mxu0 %v1332
    %1746 = vmatprep.subr.mxu0 0.0
    %1747 = vmatpush1.msra.mxu0 %v1333
    %1748 = vmatprep.subr.mxu0 0.0
    %1749 = vmatpush1.msra.mxu0 %v1334
    %1750 = vmatprep.subr.mxu0 0.0
    %1751 = vmatpush1.msra.mxu0 %v1335
    %1752 = vmatprep.subr.mxu0 0.0
    %1753 = vmatpush1.msra.mxu0 %v1336
    %1754 = vmatprep.subr.mxu0 0.0
    %1755 = vmatpush1.msra.mxu0 %v1337
    %1756 = vmatprep.subr.mxu0 0.0
    %1757 = vmatpush1.msra.mxu0 %v1338
    %1758 = vmatprep.subr.mxu0 0.0
    %1759 = vmatpush1.msra.mxu0 %v1339
    %1760 = vmatprep.subr.mxu0 0.0
    %1761 = vmatpush1.msra.mxu0 %v1340
    %1762 = vmatprep.subr.mxu0 0.0
    %1763 = vmatpush1.msra.mxu0 %v1341
    %1764 = vmatprep.subr.mxu0 0.0
    %1765 = vmatpush1.msra.mxu0 %v1342
    %1766 = vmatprep.subr.mxu0 0.0
    %1767 = vmatpush1.msra.mxu0 %v1343
    %1768 = vmatprep.subr.mxu0 0.0
    %1769 = vmatpush1.msra.mxu0 %v1344
    %1770 = vmatprep.subr.mxu0 0.0
    %1771 = vmatpush1.msra.mxu0 %v1345
    %1772 = vmatprep.subr.mxu0 0.0
    %1773 = vmatpush1.msra.mxu0 %v1346
    %1774 = vmatprep.subr.mxu0 0.0
    %1775 = vmatpush1.msra.mxu0 %v1347
    %1776 = vmatprep.subr.mxu0 0.0
    %1777 = vmatpush1.msra.mxu0 %v1348
    %1778 = vmatprep.subr.mxu0 0.0
    %1779 = vmatpush1.msra.mxu0 %v1349
    %1780 = vmatprep.subr.mxu0 0.0
    %1781 = vmatpush1.msra.mxu0 %v1350
    %1782 = vmatprep.subr.mxu0 0.0
    %1783 = vmatpush1.msra.mxu0 %v1351
    %1784 = vmatprep.subr.mxu0 0.0
    %1785 = vmatpush1.msra.mxu0 %v1352
    %1786 = vmatprep.subr.mxu0 0.0
    %1787 = vmatpush1.msra.mxu0 %v1353
    %1788 = vmatprep.subr.mxu0 0.0
    %1789 = vmatpush1.msra.mxu0 %v1354
    %1790 = vmatprep.subr.mxu0 0.0
    %1791 = vmatpush1.msra.mxu0 %v1355
    %1792 = vmatprep.subr.mxu0 0.0
    %1793 = vmatpush1.msra.mxu0 %v1356
    %1794 = vmatprep.subr.mxu0 0.0
    %1795 = vmatpush1.msra.mxu0 %v1357
    %1796 = vmatprep.subr.mxu0 0.0
    %1797 = vmatpush1.msra.mxu0 %v1358
    %1798 = vmatprep.subr.mxu0 0.0
    %1799 = vmatpush1.msra.mxu0 %v1359
    %1800 = vmatprep.subr.mxu0 0.0
    %1801 = vmatpush1.msra.mxu0 %v1360
    %1802 = vmatprep.subr.mxu0 0.0
    %1803 = vmatpush1.msra.mxu0 %v1361
    %1804 = vmatprep.subr.mxu0 0.0
    %1805 = vmatpush1.msra.mxu0 %v1362
    %1806 = vmatprep.subr.mxu0 0.0
    %1807 = vmatpush1.msra.mxu0 %v1363
    %1808 = vmatprep.mubr.f32.mxu0 %v1197
    %1809 = vmatmul.mubr.f32.gmra.mrb[0].mxu0 %v1196
    %v1810 = vpop.f32.mrb[0].mxu0
    %v1811 = vadd.f32 %v1741, %v1810
    %v1812 = vpop.f32.mrb[0].mxu0
    %1813 = vdwg.mxu0
    %1814 = vmatprep.subr.mxu0 0.0
    %1815 = vmatpush1.msra.mxu0 %v1364
    %1816 = vmatprep.subr.mxu0 0.0
    %1817 = vmatpush1.msra.mxu0 %v1365
    %1818 = vmatprep.subr.mxu0 0.0
    %1819 = vmatpush1.msra.mxu0 %v1366
    %1820 = vmatprep.subr.mxu0 0.0
    %1821 = vmatpush1.msra.mxu0 %v1367
    %1822 = vmatprep.subr.mxu0 0.0
    %1823 = vmatpush1.msra.mxu0 %v1368
    %1824 = vmatprep.subr.mxu0 0.0
    %1825 = vmatpush1.msra.mxu0 %v1369
    %1826 = vmatprep.subr.mxu0 0.0
    %1827 = vmatpush1.msra.mxu0 %v1370
    %1828 = vmatprep.subr.mxu0 0.0
    %1829 = vmatpush1.msra.mxu0 %v1371
    %1830 = vmatprep.subr.mxu0 0.0
    %1831 = vmatpush1.msra.mxu0 %v1372
    %1832 = vmatprep.subr.mxu0 0.0
    %1833 = vmatpush1.msra.mxu0 %v1373
    %1834 = vmatprep.subr.mxu0 0.0
    %1835 = vmatpush1.msra.mxu0 %v1374
    %1836 = vmatprep.subr.mxu0 0.0
    %1837 = vmatpush1.msra.mxu0 %v1375
    %1838 = vmatprep.subr.mxu0 0.0
    %1839 = vmatpush1.msra.mxu0 %v1376
    %1840 = vmatprep.subr.mxu0 0.0
    %1841 = vmatpush1.msra.mxu0 %v1377
    %1842 = vmatprep.subr.mxu0 0.0
    %1843 = vmatpush1.msra.mxu0 %v1378
    %1844 = vmatprep.subr.mxu0 0.0
    %1845 = vmatpush1.msra.mxu0 %v1379
    %1846 = vmatprep.subr.mxu0 0.0
    %1847 = vmatpush1.msra.mxu0 %v1380
    %1848 = vmatprep.subr.mxu0 0.0
    %1849 = vmatpush1.msra.mxu0 %v1381
    %1850 = vmatprep.subr.mxu0 0.0
    %1851 = vmatpush1.msra.mxu0 %v1382
    %1852 = vmatprep.subr.mxu0 0.0
    %1853 = vmatpush1.msra.mxu0 %v1383
    %1854 = vmatprep.subr.mxu0 0.0
    %1855 = vmatpush1.msra.mxu0 %v1384
    %1856 = vmatprep.subr.mxu0 0.0
    %1857 = vmatpush1.msra.mxu0 %v1385
    %1858 = vmatprep.subr.mxu0 0.0
    %1859 = vmatpush1.msra.mxu0 %v1386
    %1860 = vmatprep.subr.mxu0 0.0
    %1861 = vmatpush1.msra.mxu0 %v1387
    %1862 = vmatprep.subr.mxu0 0.0
    %1863 = vmatpush1.msra.mxu0 %v1388
    %1864 = vmatprep.subr.mxu0 0.0
    %1865 = vmatpush1.msra.mxu0 %v1389
    %1866 = vmatprep.subr.mxu0 0.0
    %1867 = vmatpush1.msra.mxu0 %v1390
    %1868 = vmatprep.subr.mxu0 0.0
    %1869 = vmatpush1.msra.mxu0 %v1391
    %1870 = vmatprep.subr.mxu0 0.0
    %1871 = vmatpush1.msra.mxu0 %v1392
    %1872 = vmatprep.subr.mxu0 0.0
    %1873 = vmatpush1.msra.mxu0 %v1393
    %1874 = vmatprep.subr.mxu0 0.0
    %1875 = vmatpush1.msra.mxu0 %v1394
    %1876 = vmatprep.subr.mxu0 0.0
    %1877 = vmatpush1.msra.mxu0 %v1395
    %1878 = vmatprep.mubr.f32.mxu0 %v1199
    %1879 = vmatmul.mubr.f32.gmra.mrb[0].mxu0 %v1198
    %v1880 = vpop.f32.mrb[0].mxu0
    %v1881 = vadd.f32 %v1811, %v1880
    %v1882 = vpop.f32.mrb[0].mxu0
    %1883 = vdwg.mxu0
    %1884 = vmatprep.subr.mxu0 0.0
    %1885 = vmatpush1.msra.mxu0 %v1396
    %1886 = vmatprep.subr.mxu0 0.0
    %1887 = vmatpush1.msra.mxu0 %v1397
    %1888 = vmatprep.subr.mxu0 0.0
    %1889 = vmatpush1.msra.mxu0 %v1398
    %1890 = vmatprep.subr.mxu0 0.0
    %1891 = vmatpush1.msra.mxu0 %v1399
    %1892 = vmatprep.subr.mxu0 0.0
    %1893 = vmatpush1.msra.mxu0 %v1400
    %1894 = vmatprep.subr.mxu0 0.0
    %1895 = vmatpush1.msra.mxu0 %v1401
    %1896 = vmatprep.subr.mxu0 0.0
    %1897 = vmatpush1.msra.mxu0 %v1402
    %1898 = vmatprep.subr.mxu0 0.0
    %1899 = vmatpush1.msra.mxu0 %v1403
    %1900 = vmatprep.subr.mxu0 0.0
    %1901 = vmatpush1.msra.mxu0 %v1404
    %1902 = vmatprep.subr.mxu0 0.0
    %1903 = vmatpush1.msra.mxu0 %v1405
    %1904 = vmatprep.subr.mxu0 0.0
    %1905 = vmatpush1.msra.mxu0 %v1406
    %1906 = vmatprep.subr.mxu0 0.0
    %1907 = vmatpush1.msra.mxu0 %v1407
    %1908 = vmatprep.subr.mxu0 0.0
    %1909 = vmatpush1.msra.mxu0 %v1408
    %1910 = vmatprep.subr.mxu0 0.0
    %1911 = vmatpush1.msra.mxu0 %v1409
    %1912 = vmatprep.subr.mxu0 0.0
    %1913 = vmatpush1.msra.mxu0 %v1410
    %1914 = vmatprep.subr.mxu0 0.0
    %1915 = vmatpush1.msra.mxu0 %v1411
    %1916 = vmatprep.subr.mxu0 0.0
    %1917 = vmatpush1.msra.mxu0 %v1412
    %1918 = vmatprep.subr.mxu0 0.0
    %1919 = vmatpush1.msra.mxu0 %v1413
    %1920 = vmatprep.subr.mxu0 0.0
    %1921 = vmatpush1.msra.mxu0 %v1414
    %1922 = vmatprep.subr.mxu0 0.0
    %1923 = vmatpush1.msra.mxu0 %v1415
    %1924 = vmatprep.subr.mxu0 0.0
    %1925 = vmatpush1.msra.mxu0 %v1416
    %1926 = vmatprep.subr.mxu0 0.0
    %1927 = vmatpush1.msra.mxu0 %v1417
    %1928 = vmatprep.subr.mxu0 0.0
    %1929 = vmatpush1.msra.mxu0 %v1418
    %1930 = vmatprep.subr.mxu0 0.0
    %1931 = vmatpush1.msra.mxu0 %v1419
    %1932 = vmatprep.subr.mxu0 0.0
    %1933 = vmatpush1.msra.mxu0 %v1420
    %1934 = vmatprep.subr.mxu0 0.0
    %1935 = vmatpush1.msra.mxu0 %v1421
    %1936 = vmatprep.subr.mxu0 0.0
    %1937 = vmatpush1.msra.mxu0 %v1422
    %1938 = vmatprep.subr.mxu0 0.0
    %1939 = vmatpush1.msra.mxu0 %v1423
    %1940 = vmatprep.subr.mxu0 0.0
    %1941 = vmatpush1.msra.mxu0 %v1424
    %1942 = vmatprep.subr.mxu0 0.0
    %1943 = vmatpush1.msra.mxu0 %v1425
    %1944 = vmatprep.subr.mxu0 0.0
    %1945 = vmatpush1.msra.mxu0 %v1426
    %1946 = vmatprep.subr.mxu0 0.0
    %1947 = vmatpush1.msra.mxu0 %v1427
    %1948 = vmatprep.mubr.f32.mxu0 %v1201
    %1949 = vmatmul.mubr.f32.gmra.mrb[0].mxu0 %v1200
    %v1950 = vpop.f32.mrb[0].mxu0
    %v1951 = vadd.f32 %v1881, %v1950
    %v1952 = vpop.f32.mrb[0].mxu0
    %1953 = vdwg.mxu0
    %1954 = vmatprep.subr.mxu0 0.0
    %1955 = vmatpush1.msra.mxu0 %v1428
    %1956 = vmatprep.subr.mxu0 0.0
    %1957 = vmatpush1.msra.mxu0 %v1429
    %1958 = vmatprep.subr.mxu0 0.0
    %1959 = vmatpush1.msra.mxu0 %v1430
    %1960 = vmatprep.subr.mxu0 0.0
    %1961 = vmatpush1.msra.mxu0 %v1431
    %1962 = vmatprep.subr.mxu0 0.0
    %1963 = vmatpush1.msra.mxu0 %v1432
    %1964 = vmatprep.subr.mxu0 0.0
    %1965 = vmatpush1.msra.mxu0 %v1433
    %1966 = vmatprep.subr.mxu0 0.0
    %1967 = vmatpush1.msra.mxu0 %v1434
    %1968 = vmatprep.subr.mxu0 0.0
    %1969 = vmatpush1.msra.mxu0 %v1435
    %1970 = vmatprep.subr.mxu0 0.0
    %1971 = vmatpush1.msra.mxu0 %v1436
    %1972 = vmatprep.subr.mxu0 0.0
    %1973 = vmatpush1.msra.mxu0 %v1437
    %1974 = vmatprep.subr.mxu0 0.0
    %1975 = vmatpush1.msra.mxu0 %v1438
    %1976 = vmatprep.subr.mxu0 0.0
    %1977 = vmatpush1.msra.mxu0 %v1439
    %1978 = vmatprep.subr.mxu0 0.0
    %1979 = vmatpush1.msra.mxu0 %v1440
    %1980 = vmatprep.subr.mxu0 0.0
    %1981 = vmatpush1.msra.mxu0 %v1441
    %1982 = vmatprep.subr.mxu0 0.0
    %1983 = vmatpush1.msra.mxu0 %v1442
    %1984 = vmatprep.subr.mxu0 0.0
    %1985 = vmatpush1.msra.mxu0 %v1443
    %1986 = vmatprep.subr.mxu0 0.0
    %1987 = vmatpush1.msra.mxu0 %v1444
    %1988 = vmatprep.subr.mxu0 0.0
    %1989 = vmatpush1.msra.mxu0 %v1445
    %1990 = vmatprep.subr.mxu0 0.0
    %1991 = vmatpush1.msra.mxu0 %v1446
    %1992 = vmatprep.subr.mxu0 0.0
    %1993 = vmatpush1.msra.mxu0 %v1447
    %1994 = vmatprep.subr.mxu0 0.0
    %1995 = vmatpush1.msra.mxu0 %v1448
    %1996 = vmatprep.subr.mxu0 0.0
    %1997 = vmatpush1.msra.mxu0 %v1449
    %1998 = vmatprep.subr.mxu0 0.0
    %1999 = vmatpush1.msra.mxu0 %v1450
    %2000 = vmatprep.subr.mxu0 0.0
    %2001 = vmatpush1.msra.mxu0 %v1451
    %2002 = vmatprep.subr.mxu0 0.0
    %2003 = vmatpush1.msra.mxu0 %v1452
    %2004 = vmatprep.subr.mxu0 0.0
    %2005 = vmatpush1.msra.mxu0 %v1453
    %2006 = vmatprep.subr.mxu0 0.0
    %2007 = vmatpush1.msra.mxu0 %v1454
    %2008 = vmatprep.subr.mxu0 0.0
    %2009 = vmatpush1.msra.mxu0 %v1455
    %2010 = vmatprep.subr.mxu0 0.0
    %2011 = vmatpush1.msra.mxu0 %v1456
    %2012 = vmatprep.subr.mxu0 0.0
    %2013 = vmatpush1.msra.mxu0 %v1457
    %2014 = vmatprep.subr.mxu0 0.0
    %2015 = vmatpush1.msra.mxu0 %v1458
    %2016 = vmatprep.subr.mxu0 0.0
    %2017 = vmatpush1.msra.mxu0 %v1459
    %2018 = vmatprep.mubr.f32.mxu0 %v1203
    %2019 = vmatmul.mubr.f32.gmra.mrb[0].mxu0 %v1202
    %v2020 = vpop.f32.mrb[0].mxu0
    %v2021 = vadd.f32 %v1951, %v2020
    %v2022 = vpop.f32.mrb[0].mxu0
    %2023 = vdwg.mxu0
    %v2024 = vadd.f32 %v520, %v2021
    %v2025 = vsel %vm209, %v2024, 0.0
    %2026 = vadd.xlane.f32.xlu0 %v2025
    %v2027 = vpop.xlane.xlu0 %2026
    %v2028 = vmul.f32 %v2027, %v500
    %v2029 = vsub.f32 %v2024, %v2028
    %v2030 = vmul.f32 %v2029, %v2029
    %v2031 = vsel %vm209, %v2030, 0.0
    %2032 = vadd.xlane.f32.xlu0 %v2031
    %v2033 = vpop.xlane.xlu0 %2032
    %v2034 = vmul.f32 %v2033, %v500
    %v2035 = vadd.f32 %v2034, 1e-05
    %v2036 = vrsqrt.pop %v2035
    %v2037 = vmul.f32 %v2029, %v2036
    %v2038 = vlaneseq
    %v2039 = vshrl.u32 %v2038, 7
    %v2040 = vsub.s32 7, %v2039
    %v2041 = vrot.slane %v25, %v2040
    %v2042 = vmul.f32 %v2037, %v2041
    %v2043 = vlaneseq
    %v2044 = vshrl.u32 %v2043, 7
    %v2045 = vsub.s32 0, %v2044
    %v2046 = vrot.slane %v26, %v2045
    %v2047 = vadd.f32 %v2042, %v2046
    %v2048 = vsel %vm209, %v2047, 0.0
    %2049 = vadd.xlane.f32.xlu0 %v2048
    %v2050 = vpop.xlane.xlu0 %2049
    %v2051 = vmul.f32 %v2050, %v500
    %v2052 = vsub.f32 %v2047, %v2051
    %v2053 = vmul.f32 %v2052, %v2052
    %v2054 = vsel %vm209, %v2053, 0.0
    %2055 = vadd.xlane.f32.xlu0 %v2054
    %v2056 = vpop.xlane.xlu0 %2055
    %v2057 = vmul.f32 %v2056, %v500
    %v2058 = vadd.f32 %v2057, 1e-05
    %v2059 = vrsqrt.pop %v2058
    %v2060 = vmul.f32 %v2052, %v2059
    %v2061 = vlaneseq
    %v2062 = vshrl.u32 %v2061, 7
    %v2063 = vsub.s32 1, %v2062
    %v2064 = vrot.slane %v26, %v2063
    %v2065 = vmul.f32 %v2060, %v2064
    %v2066 = vlaneseq
    %v2067 = vshrl.u32 %v2066, 7
    %v2068 = vsub.s32 2, %v2067
    %v2069 = vrot.slane %v26, %v2068
    %v2070 = vadd.f32 %v2065, %v2069
    %2071 = vst.msk [vmem:[#allocation2] sm:$0x3] %vm209, %v2070
    // Predicated region
    $region22: #{dummy_encoder_forward.1} parent=1 // pred_check
      _
    $region23: #{dummy_encoder_forward.1} parent=1 // pred_check_branch
      %2073 = sbr.rel (0) target = $region25
    $region24: #{dummy_encoder_forward.1} parent=1 // pred_region
      %s2075 = ssub.s32 32, 32
      %2076 = vsyncadd [#allocation3], %s2075
      %s2078 = sshll.u32 [#allocation2], 4
      %s2079 = int_to_ptr.vmem [resolvable:$true] %s2078
      %2081 = dma.vmem_to_hbm [thread:$0]  %s2079, 32, %s5, [#allocation3]
    $region25: #{dummy_encoder_forward.1} parent=1 // pred_fallthru
      _
    // Predicated region
    $region26: #{dummy_encoder_forward.1} parent=1 // pred_check
      _
    $region27: #{dummy_encoder_forward.1} parent=1 // pred_check_branch
      %2083 = sbr.rel (0) target = $region29
    $region28: #{dummy_encoder_forward.1} parent=1 // pred_region
      %2084 = dma.done [#allocation3], 32
    $region29: #{dummy_encoder_forward.1} parent=1 // pred_fallthru
      _
    %2085 = vsyncpa [#allocation3], 1

</llo_original>
